<compile_context>
chip_gen: v6e
topology: v6e:2x2x1
jax: 0.10.0
libtpu: 0.0.40
codegen_flags: <defaults>
</compile_context>

<pallas_src>
import numpy as np
import jax
import jax.numpy as jnp
from jax.experimental import pallas as pl
from jax.experimental.pallas import tpu as pltpu


# ----------------------------- Pallas kernel -------------------------------

def _quantum_linear_kernel(x_ref, sel_ref, ut_ref, zsgn_ref, o_ref):
    """Single grid step = all (packed) circuits, one batch tile.

    x_ref    : (TB, Fp)              angles, Fp = PACK * n_circuits * num_qubits
    sel_ref  : (2*Fp, NQ*NCDIMp)     fused cos/sin 0-1 selector (cos rows first)
    ut_ref   : (NCDIMp, NCDIMp)      block-diagonal transposed circuit unitaries
    zsgn_ref : (NCDIMp, Fp)          block-diagonal PauliZ sign table
    o_ref    : (TB, Fp)              concatenated <Z_q> expectation values
    """
    x = x_ref[...].astype(jnp.float32)
    c = jnp.cos(0.5 * x)                                   # (TB, Fp)
    s = jnp.sin(0.5 * x)                                   # (TB, Fp)
    cs = jnp.concatenate([c, s], axis=1)                   # (TB, 2*Fp), lane-aligned

    ncdim = ut_ref.shape[0]                                # static
    nq = sel_ref.shape[1] // ncdim                         # static

    # AngleEmbedding(rotation='Y') on |0...0>, all circuits at once.  One fused
    # MXU matmul produces, for each qubit q, the per-basis-state factor
    # (bit_q ? sin : cos); the amplitude is their elementwise product.
    fac = jnp.dot(cs, sel_ref[...], preferred_element_type=jnp.float32)  # (TB, nq*ncdim)
    amp = fac[:, :ncdim]
    for q in range(1, nq):                                 # static unroll, nq small
        amp = amp * fac[:, q * ncdim:(q + 1) * ncdim]

    # Variational layers for every (packed) circuit in one wide MXU matmul.
    psi = jnp.dot(amp, ut_ref[...], preferred_element_type=jnp.float32)
    probs = psi * psi                                      # real circuit => |psi|^2
    # Block-diagonal PauliZ reduction -> lane-dense (TB, Fp) output.
    o_ref[...] = jnp.dot(probs, zsgn_ref[...],
                         preferred_element_type=jnp.float32).astype(o_ref.dtype)


# ------------------------------- wrapper ------------------------------------

def _round_up(a, m):
    return ((a + m - 1) // m) * m


def _pick_batch_tile(bp_rows):
    """Sublane-aligned packed-row tile.  Small batches: one 8-row tile.
    Large batches: >=2 grid steps (v7x megacore) capped at 1024 rows/tile."""
    if bp_rows <= 8:
        return 8
    tb = _round_up((bp_rows + 1) // 2, 8)
    return min(tb, 1024)


def quantum_linear_forward(x, sel, ut_bd, zsgn_bd, pack):
    """x: (B, F) f32.  sel: (2*PACK*F, NQ*NCDIMp); ut_bd: (NCDIMp, NCDIMp);
    zsgn_bd: (NCDIMp, PACK*F).  Returns (B, F) == torch.cat([...], dim=1)."""
    B, F = x.shape
    Fp = pack * F
    ncdimp = ut_bd.shape[0]
    assert sel.shape[0] == 2 * Fp and sel.shape[1] % ncdimp == 0
    assert zsgn_bd.shape == (ncdimp, Fp)

    bp_rows = -(-B // pack)                      # packed rows = ceil(B / PACK)
    TB = _pick_batch_tile(bp_rows)
    bp_pad = _round_up(bp_rows, TB)
    b_pad = bp_pad * pack
    if b_pad != B:                               # zero-pad; padded rows sliced off
        x = jnp.pad(x, ((0, b_pad - B), (0, 0)))
    xp = x.reshape(bp_pad, Fp)                   # 4 batch rows per lane-dense row

    grid = (bp_pad // TB,)
    out = pl.pallas_call(
        _quantum_linear_kernel,
        out_shape=jax.ShapeDtypeStruct((bp_pad, Fp), jnp.float32),
        grid_spec=pltpu.PrefetchScalarGridSpec(
            num_scalar_prefetch=0,
            grid=grid,
            in_specs=[
                pl.BlockSpec((TB, Fp), lambda b: (b, 0)),
                pl.BlockSpec(sel.shape, lambda b: (0, 0)),      # constants: DMA'd once
                pl.BlockSpec(ut_bd.shape, lambda b: (0, 0)),
                pl.BlockSpec(zsgn_bd.shape, lambda b: (0, 0)),
            ],
            out_specs=pl.BlockSpec((TB, Fp), lambda b: (b, 0)),
        ),
        compiler_params=pltpu.CompilerParams(
            dimension_semantics=("parallel",)),
    )(xp, sel, ut_bd, zsgn_bd)

    return out.reshape(b_pad, F)[:B]


# ----------------------- parameter / constant setup (glue) ------------------

def make_weights(key, in_features, num_qubits, n_layers):
    """Per-circuit weights, xavier_uniform_ like the PyTorch __init__.
    weight_shapes = {"weights": (n_layers, num_qubits)} per circuit."""
    n_circuits = in_features // num_qubits
    fan_in, fan_out = num_qubits, n_layers
    bound = float(np.sqrt(6.0 / (fan_in + fan_out)))
    return jax.random.uniform(key, (n_circuits, n_layers, num_qubits),
                              jnp.float32, -bound, bound)


def _cnot_ring_matrix(nq):
    """Permutation matrix for CNOT(0,1), CNOT(1,2), ..., CNOT(nq-1,0)."""
    dim = 2 ** nq
    pairs = [(0, 1)] if nq == 2 else [(q, (q + 1) % nq) for q in range(nq)]
    U = np.eye(dim, dtype=np.float32)
    for ctrl, tgt in pairs:
        P = np.zeros((dim, dim), np.float32)
        for col in range(dim):
            if (col >> (nq - 1 - ctrl)) & 1:
                row = col ^ (1 << (nq - 1 - tgt))
            else:
                row = col
            P[row, col] = 1.0
        U = P @ U
    return jnp.asarray(U)


def _ry(theta):
    c = jnp.cos(0.5 * theta)
    s = jnp.sin(0.5 * theta)
    return jnp.stack([jnp.stack([c, -s]), jnp.stack([s, c])])


def build_circuit_unitaries_t(weights, num_qubits):
    """weights: (n_circuits, n_layers, num_qubits) -> (n_circuits, DIM, DIM)
    of per-circuit U^T (ready for `amp @ U^T`)."""
    n_circuits, n_layers, nq = weights.shape
    dim = 2 ** nq
    cnot = _cnot_ring_matrix(nq)
    uts = []
    for ci in range(n_circuits):
        U = jnp.eye(dim, dtype=jnp.float32)
        for l in range(n_layers):
            R = _ry(weights[ci, l, 0])           # wire 0 = MSB factor
            for q in range(1, nq):
                R = jnp.kron(R, _ry(weights[ci, l, q]))
            U = cnot @ R @ U                     # rotations, then CNOT ring
        uts.append(U.T)
    return jnp.stack(uts)


def block_diag_stack(mats):
    """(NC, DIM, DIM) -> (NC*DIM, NC*DIM) block diagonal."""
    NC, DIM, _ = mats.shape
    eye = jnp.eye(NC, dtype=mats.dtype)
    return jnp.einsum('ij,irc->irjc', eye, mats).reshape(NC * DIM, NC * DIM)


def _z_sign_table(nq):
    dim = 2 ** nq
    idx = np.arange(dim)[:, None]
    q = np.arange(nq)[None, :]
    bits = (idx >> (nq - 1 - q)) & 1
    return jnp.asarray((1.0 - 2.0 * bits).astype(np.float32))


def _z_sign_block_diag(nc, nq):
    dim = 2 ** nq
    zs = np.asarray(_z_sign_table(nq))                     # (DIM, NQ)
    bd = np.zeros((nc * dim, nc * nq), np.float32)
    for i in range(nc):
        bd[i * dim:(i + 1) * dim, i * nq:(i + 1) * nq] = zs
    return jnp.asarray(bd)


def _fused_embedding_selector(nc, nq):
    """Single fused 0/1 selector so the angle-embedding factors come from ONE
    MXU matmul of concat([cos, sin]) of shape (TB, 2F):
      rows [0, F)   : cos selectors, rows [F, 2F) : sin selectors
      cols [q*NCDIM, (q+1)*NCDIM) : per-qubit-q factor for every basis column
    with column j = i*DIM + k (circuit i, basis state k) and feature f=i*NQ+q."""
    dim = 2 ** nq
    F = nc * nq
    ncdim = nc * dim
    sel = np.zeros((2 * F, nq * ncdim), np.float32)
    for q in range(nq):
        for j in range(ncdim):
            i, k = divmod(j, dim)
            bit = (k >> (nq - 1 - q)) & 1
            f = i * nq + q
            col = q * ncdim + j
            if bit:
                sel[F + f, col] = 1.0            # sin
            else:
                sel[f, col] = 1.0                # cos
    return jnp.asarray(sel)


# --------------------------- pure-JAX reference ------------------------------

def reference_forward(x, unitaries_t, zsgn, num_qubits):
    """Per-circuit simulation, independent of the packed block-diagonal path."""
    B, in_features = x.shape
    n_circuits, dim, _ = unitaries_t.shape
    nq = num_qubits
    xr = x.reshape(B, n_circuits, nq)
    idx = np.arange(dim)
    outs = []
    for i in range(n_circuits):
        xi = xr[:, i, :]
        c = jnp.cos(0.5 * xi)
        s = jnp.sin(0.5 * xi)
        amp = jnp.ones((B, dim), jnp.float32)
        for q in range(nq):
            bit = (idx >> (nq - 1 - q)) & 1
            amp = amp * jnp.where(bit[None, :] == 1, s[:, q:q + 1], c[:, q:q + 1])
        psi = jnp.dot(amp, unitaries_t[i], precision=jax.lax.Precision.HIGHEST)
        outs.append(jnp.dot(psi * psi, zsgn, precision=jax.lax.Precision.HIGHEST))
    return jnp.concatenate(outs, axis=1)


# ---------------------------------- main -------------------------------------

if __name__ == "__main__":
    # TODO(synk): the real q_circuit is user-supplied via PennyLane; this script
    # fixes a concrete synthetic circuit (RY angle embedding + RY entangler
    # layers + PauliZ expvals) and simulates it exactly.  Circuits with complex
    # gates (RX/RZ/phases) would need a complex (real+imag) statevector path.
    B = 2
    num_qubits = 4            # DIM = 16
    in_features = 32          # -> n_circuits = 8  (embedding='n'), NCDIM = 128
    n_layers = 2              # weight_shapes = {"weights": (2, 4)}
    out_features = in_features  # unused by forward, kept for parity with module

    key = jax.random.PRNGKey(0)
    kx, kw = jax.random.split(key)
    x = jax.random.normal(kx, (B, in_features), jnp.float32)

    n_circuits = in_features // num_qubits
    F = in_features
    PACK = max(1, 128 // F) if F < 128 else 1              # lane-pack factor (=4 here)
    nc_packed = PACK * n_circuits                          # virtual circuits per row

    weights = make_weights(kw, in_features, num_qubits, n_layers)
    unitaries_t = build_circuit_unitaries_t(weights, num_qubits)   # (NC, DIM, DIM)
    ut_packed = jnp.tile(unitaries_t, (PACK, 1, 1))                # (PACK*NC, DIM, DIM)
    ut_bd = block_diag_stack(ut_packed)                            # (512, 512)
    sel = _fused_embedding_selector(nc_packed, num_qubits)         # (256, 2048)
    zsgn_bd = _z_sign_block_diag(nc_packed, num_qubits)            # (512, 128)
    zsgn = _z_sign_table(num_qubits)                               # (16, 4)

    y = quantum_linear_forward(x, sel, ut_bd, zsgn_bd, PACK)
    y = jax.block_until_ready(y)

    y_ref = reference_forward(x, unitaries_t, zsgn, num_qubits)
    assert y.shape == (B, in_features)
    np.testing.assert_allclose(np.asarray(y), np.asarray(y_ref),
                               atol=1e-5, rtol=1e-5)
    print("KERNEL_OK")
</pallas_src>

<mosaic_0001>
module attributes {stable_mosaic.version = 11 : i64} {
  func.func @_quantum_linear_kernel(%arg0: i32, %arg1: memref<8x128xf32, #tpu.memory_space<vmem>>, %arg2: memref<256x2048xf32, #tpu.memory_space<vmem>>, %arg3: memref<512x512xf32, #tpu.memory_space<vmem>>, %arg4: memref<512x128xf32, #tpu.memory_space<vmem>>, %arg5: memref<8x128xf32, #tpu.memory_space<vmem>>) attributes {dimension_semantics = [#tpu.dimension_semantics<parallel>], iteration_bounds = array<i64: 1>, scalar_prefetch = 0 : i64, scratch_operands = 0 : i64, tpu.core_type = #tpu.core_type<tc>, window_params = [{transform_indices = @transform_0, window_bounds = array<i64: 8, 128>}, {pipeline_mode = #tpu.pipeline_mode<synchronous>, transform_indices = @transform_1, window_bounds = array<i64: 256, 2048>}, {pipeline_mode = #tpu.pipeline_mode<synchronous>, transform_indices = @transform_2, window_bounds = array<i64: 512, 512>}, {pipeline_mode = #tpu.pipeline_mode<synchronous>, transform_indices = @transform_3, window_bounds = array<i64: 512, 128>}, {transform_indices = @transform_4, window_bounds = array<i64: 8, 128>}]} {
    %c0 = arith.constant 0 : index
    %c0_0 = arith.constant 0 : index
    %0 = vector.load %arg1[%c0, %c0_0] : memref<8x128xf32, #tpu.memory_space<vmem>>, vector<8x128xf32>
    %cst = arith.constant 5.000000e-01 : f32
    %1 = vector.broadcast %cst : f32 to vector<8x128xf32>
    %2 = arith.mulf %1, %0 : vector<8x128xf32>
    %3 = math.cos %2 : vector<8x128xf32>
    %cst_1 = arith.constant 5.000000e-01 : f32
    %4 = vector.broadcast %cst_1 : f32 to vector<8x128xf32>
    %5 = arith.mulf %4, %0 : vector<8x128xf32>
    %6 = math.sin %5 : vector<8x128xf32>
    %7 = tpu.concatenate %3, %6 in 1 : vector<8x128xf32>, vector<8x128xf32> -> vector<8x256xf32>
    %c0_2 = arith.constant 0 : index
    %c0_3 = arith.constant 0 : index
    %8 = vector.load %arg2[%c0_2, %c0_3] : memref<256x2048xf32, #tpu.memory_space<vmem>>, vector<256x2048xf32>
    %cst_4 = arith.constant dense<0.000000e+00> : vector<8x2048xf32>
    %9 = tpu.matmul %7, %8, %cst_4 {dimension_numbers = #tpu.dot_dimension_numbers<[1], [0], [0], [1], [0, 0, 1, 1], [], []>} : vector<8x256xf32>, vector<256x2048xf32>, vector<8x2048xf32> -> vector<8x2048xf32>
    %10 = vector.extract_strided_slice %9 {offsets = [0, 0], sizes = [8, 512], strides = [1, 1]} : vector<8x2048xf32> to vector<8x512xf32>
    %11 = vector.extract_strided_slice %9 {offsets = [0, 512], sizes = [8, 512], strides = [1, 1]} : vector<8x2048xf32> to vector<8x512xf32>
    %12 = arith.mulf %10, %11 : vector<8x512xf32>
    %13 = vector.extract_strided_slice %9 {offsets = [0, 1024], sizes = [8, 512], strides = [1, 1]} : vector<8x2048xf32> to vector<8x512xf32>
    %14 = arith.mulf %12, %13 : vector<8x512xf32>
    %15 = vector.extract_strided_slice %9 {offsets = [0, 1536], sizes = [8, 512], strides = [1, 1]} : vector<8x2048xf32> to vector<8x512xf32>
    %16 = arith.mulf %14, %15 : vector<8x512xf32>
    %c0_5 = arith.constant 0 : index
    %c0_6 = arith.constant 0 : index
    %17 = vector.load %arg3[%c0_5, %c0_6] : memref<512x512xf32, #tpu.memory_space<vmem>>, vector<512x512xf32>
    %cst_7 = arith.constant dense<0.000000e+00> : vector<8x512xf32>
    %18 = tpu.matmul %16, %17, %cst_7 {dimension_numbers = #tpu.dot_dimension_numbers<[1], [0], [0], [1], [0, 0, 1, 1], [], []>} : vector<8x512xf32>, vector<512x512xf32>, vector<8x512xf32> -> vector<8x512xf32>
    %19 = arith.mulf %18, %18 : vector<8x512xf32>
    %c0_8 = arith.constant 0 : index
    %c0_9 = arith.constant 0 : index
    %20 = vector.load %arg4[%c0_8, %c0_9] : memref<512x128xf32, #tpu.memory_space<vmem>>, vector<512x128xf32>
    %cst_10 = arith.constant dense<0.000000e+00> : vector<8x128xf32>
    %21 = tpu.matmul %19, %20, %cst_10 {dimension_numbers = #tpu.dot_dimension_numbers<[1], [0], [0], [1], [0, 0, 1, 1], [], []>} : vector<8x512xf32>, vector<512x128xf32>, vector<8x128xf32> -> vector<8x128xf32>
    %c0_11 = arith.constant 0 : index
    %c0_12 = arith.constant 0 : index
    %22 = vector.load %arg5[%c0_11, %c0_12] : memref<8x128xf32, #tpu.memory_space<vmem>>, vector<8x128xf32>
    tpu.vector_store %arg5[%c0_11, %c0_12], %21 {strides = array<i32>} : memref<8x128xf32, #tpu.memory_space<vmem>>, vector<8x128xf32>,
    return
  }
  func.func @transform_0(%arg0: i32) -> (i32, i32) {
    %c0_i32 = arith.constant 0 : i32
    %c0_i32_0 = arith.constant 0 : i32
    return %arg0, %c0_i32 : i32, i32
  }
  func.func @transform_1(%arg0: i32) -> (i32, i32) {
    %c0_i32 = arith.constant 0 : i32
    %c0_i32_0 = arith.constant 0 : i32
    %c0_i32_1 = arith.constant 0 : i32
    return %c0_i32, %c0_i32_0 : i32, i32
  }
  func.func @transform_2(%arg0: i32) -> (i32, i32) {
    %c0_i32 = arith.constant 0 : i32
    %c0_i32_0 = arith.constant 0 : i32
    %c0_i32_1 = arith.constant 0 : i32
    return %c0_i32, %c0_i32_0 : i32, i32
  }
  func.func @transform_3(%arg0: i32) -> (i32, i32) {
    %c0_i32 = arith.constant 0 : i32
    %c0_i32_0 = arith.constant 0 : i32
    %c0_i32_1 = arith.constant 0 : i32
    return %c0_i32, %c0_i32_0 : i32, i32
  }
  func.func @transform_4(%arg0: i32) -> (i32, i32) {
    %c0_i32 = arith.constant 0 : i32
    %c0_i32_0 = arith.constant 0 : i32
    return %arg0, %c0_i32 : i32, i32
  }
}

</mosaic_0001>

<llo_original>
// kernel: tpu_custom_call.1
$region0: #{tpu_custom_call.1}
  #allocation0 [shape = 'u32[]', space=smem, size = 0x4, offset = 0x4, fixed_abs, tag = 'smem constant byte address 0x4 - core index']
  #allocation1 [shape = 'u32[144,128]{1,0:T(1,128)}', space=vmem, size = 0x12000, scoped, tag = 'internal scratch']
  %s0 = inlined_call_operand.hbm [shape: f32[8,128], index: 0, kind: input, shape index: {}]
  %s1 = inlined_call_operand.hbm [shape: f32[256,2048], index: 1, kind: input, shape index: {}]
  %s2 = inlined_call_operand.hbm [shape: f32[512,512], index: 2, kind: input, shape index: {}]
  %s3 = inlined_call_operand.hbm [shape: f32[512,128], index: 3, kind: input, shape index: {}]
  %s4 = inlined_call_operand.hbm [shape: f32[8,128], index: 4, kind: output, shape index: {}]
  %s5 = sld [smem:[#allocation0]]
  $region42: #{tpu_custom_call.1} parent=0
    _
  %s7 = ssub.s32 1, %s5
  %s8 = scalar_select 0, %s7, %s5
  $region1: #{tpu_custom_call.1} parent=0
    #allocation2 [shape = 'u8[4096]{0}', space=vmem, size = 0x1000, scoped, tag = 'input window, operand 0, single buffered']
    #allocation3 [shape = 's32[1]{0}', space=sflag, size = 0x4, scoped, tag = 'scoped memory for tpu_custom_call.1']
    #allocation4 [shape = 's32[1]{0}', space=sflag, size = 0x4, scoped, tag = 'scoped memory for tpu_custom_call.1']
    #allocation5 [shape = 'u8[2097152]{0}', space=vmem, size = 0x200000, scoped, tag = 'input window, operand 1, single buffered']
    #allocation6 [shape = 's32[1]{0}', space=sflag, size = 0x4, scoped, tag = 'scoped memory for tpu_custom_call.1']
    #allocation7 [shape = 'u8[1048576]{0}', space=vmem, size = 0x100000, scoped, tag = 'input window, operand 2, single buffered']
    #allocation8 [shape = 'u8[262144]{0}', space=vmem, size = 0x40000, scoped, tag = 'input window, operand 3, single buffered']
    #allocation9 [shape = 's32[1]{0}', space=sflag, size = 0x4, scoped, tag = 'scoped memory for tpu_custom_call.1']
    #allocation10 [shape = 'u8[4096]{0}', space=vmem, size = 0x1000, scoped, tag = 'output window, operand 0, single buffered']
    %9 = vsyncpa [#allocation3], 0
    %10 = vsyncpa [#allocation6], 0
    %11 = vsyncpa [#allocation9], 0
    %12 = vsyncpa [#allocation4], 0
    // Predicated region
    $region2: #{tpu_custom_call.1} parent=1 // pred_check
      _
    $region3: #{tpu_custom_call.1} parent=1 // pred_check_branch
      %14 = sbr.rel (0) target = $region5
    $region4: #{tpu_custom_call.1} parent=1 // pred_region
      %s16 = ssub.s32 128, 128
      %17 = vsyncadd [#allocation3], %s16
      %s19 = sshll.u32 [#allocation2], 4
      %s20 = int_to_ptr.vmem [resolvable:$true] %s19
      %22 = dma.hbm_to_vmem [thread:$0]  %s0, 128, %s20, [#allocation3]
    $region5: #{tpu_custom_call.1} parent=1 // pred_fallthru
      _
    // Predicated region
    $region6: #{tpu_custom_call.1} parent=1 // pred_check
      _
    $region7: #{tpu_custom_call.1} parent=1 // pred_check_branch
      %24 = sbr.rel (0) target = $region9
    $region8: #{tpu_custom_call.1} parent=1 // pred_region
      %s26 = ssub.s32 65536, 65536
      %27 = vsyncadd [#allocation6], %s26
      %s28 = sshll.u32 [#allocation5], 4
      %s29 = int_to_ptr.vmem [resolvable:$true] %s28
      %34 = dma.hbm_to_vmem [thread:$0]  %s1, 65536, %s29, [#allocation6], 2048, 2048, 128
    $region9: #{tpu_custom_call.1} parent=1 // pred_fallthru
      _
    // Predicated region
    $region10: #{tpu_custom_call.1} parent=1 // pred_check
      _
    $region11: #{tpu_custom_call.1} parent=1 // pred_check_branch
      %36 = sbr.rel (0) target = $region13
    $region12: #{tpu_custom_call.1} parent=1 // pred_region
      %s38 = ssub.s32 32768, 32768
      %39 = vsyncadd [#allocation6], %s38
      %s40 = sshll.u32 [#allocation7], 4
      %s41 = int_to_ptr.vmem [resolvable:$true] %s40
      %46 = dma.hbm_to_vmem [thread:$0]  %s2, 32768, %s41, [#allocation6], 512, 512, 32
    $region13: #{tpu_custom_call.1} parent=1 // pred_fallthru
      _
    // Predicated region
    $region14: #{tpu_custom_call.1} parent=1 // pred_check
      _
    $region15: #{tpu_custom_call.1} parent=1 // pred_check_branch
      %48 = sbr.rel (0) target = $region17
    $region16: #{tpu_custom_call.1} parent=1 // pred_region
      %s50 = ssub.s32 8192, 8192
      %51 = vsyncadd [#allocation9], %s50
      %s52 = sshll.u32 [#allocation8], 4
      %s53 = int_to_ptr.vmem [resolvable:$true] %s52
      %58 = dma.hbm_to_vmem [thread:$0]  %s3, 8192, %s53, [#allocation9], 128, 128, 8
    $region17: #{tpu_custom_call.1} parent=1 // pred_fallthru
      _
    // Predicated region
    $region18: #{tpu_custom_call.1} parent=1 // pred_check
      _
    $region19: #{tpu_custom_call.1} parent=1 // pred_check_branch
      %60 = sbr.rel (0) target = $region21
    $region20: #{tpu_custom_call.1} parent=1 // pred_region
      %61 = dma.done [#allocation3], 128
    $region21: #{tpu_custom_call.1} parent=1 // pred_fallthru
      _
    // Predicated region
    $region22: #{tpu_custom_call.1} parent=1 // pred_check
      _
    $region23: #{tpu_custom_call.1} parent=1 // pred_check_branch
      %63 = sbr.rel (0) target = $region25
    $region24: #{tpu_custom_call.1} parent=1 // pred_region
      %64 = dma.done [#allocation6], 65536
    $region25: #{tpu_custom_call.1} parent=1 // pred_fallthru
      _
    // Predicated region
    $region26: #{tpu_custom_call.1} parent=1 // pred_check
      _
    $region27: #{tpu_custom_call.1} parent=1 // pred_check_branch
      %66 = sbr.rel (0) target = $region29
    $region28: #{tpu_custom_call.1} parent=1 // pred_region
      %67 = dma.done [#allocation6], 32768
    $region29: #{tpu_custom_call.1} parent=1 // pred_fallthru
      _
    // Predicated region
    $region30: #{tpu_custom_call.1} parent=1 // pred_check
      _
    $region31: #{tpu_custom_call.1} parent=1 // pred_check_branch
      %69 = sbr.rel (0) target = $region33
    $region32: #{tpu_custom_call.1} parent=1 // pred_region
      %70 = dma.done [#allocation9], 8192
    $region33: #{tpu_custom_call.1} parent=1 // pred_fallthru
      _
    %v71 = vld [vmem:[#allocation2] sm:$0xff]
    %v72 = vmul.f32 %v71, 0.5
    %v73 = vand.u32 2147483647, %v72
    %vm74 = vcmp.le.f32.partialorder %v73, 0.7853982
    %vm75 = vcmp.lt.s32.totalorder %v72, 0
    %v76 = vand.u32 %v72, 2139095040
    %v77 = vshrl.u32 %v76, 23
    %v78 = vsub.s32 %v77, 127
    %v79 = vand.u32 2147483647, %v72
    %v80 = vand.u32 %v79, 8388607
    %v81 = vor.u32 %v80, 8388608
    %v82 = vsub.s32 0, %v81
    %v83 = vadd.s32 %v78, 1
    %vm84 = vcmp.gt.s32.totalorder %v83, 0
    %v85 = vsel %vm84, %v83, 0
    %v86 = vshrl.u32 %v85, 5
    %v87 = vand.u32 %v85, 31
    %v88 = vsub.s32 32, %v87
    %v89 = vshrl.u32 683565275, %v88
    %v90 = vshll.u32 683565275, %v87
    %v91 = vshrl.u32 2475754826, %v88
    %v92 = vor.u32 %v90, %v91
    %v93 = vshll.u32 2475754826, %v87
    %v94 = vshrl.u32 2131351028, %v88
    %v95 = vor.u32 %v93, %v94
    %v96 = vshll.u32 2131351028, %v87
    %v97 = vshrl.u32 2102212464, %v88
    %v98 = vor.u32 %v96, %v97
    %v99 = vshll.u32 2102212464, %v87
    %v100 = vshrl.u32 920167782, %v88
    %v101 = vor.u32 %v99, %v100
    %v102 = vshll.u32 920167782, %v87
    %v103 = vshrl.u32 1326507024, %v88
    %v104 = vor.u32 %v102, %v103
    %vm105 = vcmp.lt.s32.totalorder %v86, 1
    %vm106 = vcmp.lt.s32.totalorder %v86, 2
    %vm107 = vcmp.lt.s32.totalorder %v86, 3
    %vm108 = vcmp.lt.s32.totalorder %v86, 4
    %v109 = vsel %vm105, %v89, %v92
    %v110 = vsel %vm108, %v98, 2102212464
    %v111 = vsel %vm107, %v95, %v110
    %v112 = vsel %vm106, %v109, %v111
    %v113 = vsel %vm105, %v92, %v95
    %v114 = vsel %vm108, %v101, 920167782
    %v115 = vsel %vm107, %v98, %v114
    %v116 = vsel %vm106, %v113, %v115
    %v117 = vsel %vm105, %v95, %v98
    %v118 = vsel %vm108, %v104, 1326507024
    %v119 = vsel %vm107, %v101, %v118
    %v120 = vsel %vm106, %v117, %v119
    %v121 = vshll.u32 %v81, 8
    %v122 = vmul.u32.u64.compose %v121, %v120
    %v123 = vextract.low.u32 %v122
    %v124 = vextract.high.u32 %v122
    %v125 = vmul.u32.u64.compose %v121, %v116
    %v126 = vextract.low.u32 %v125
    %v127 = vextract.high.u32 %v125
    %v128 = vmul.u32 %v121, %v112
    %v129 = vadd.s32 %v124, %v126
    %vm130 = vc.u32 %v124, %v126
    %v131 = vadd.s32 %v127, 1
    %v132 = vsel %vm130, %v131, %v127
    %v133 = vadd.s32 %v128, %v132
    %v134 = vadd.s32 %v133, 536870912
    %v135 = vshrl.u32 %v134, 30
    %v136 = vshll.u32 %v135, 30
    %v137 = vsub.s32 %v133, %v136
    %vm138 = vcmp.lt.s32.totalorder %v137, 0
    %v139 = vsub.s32 0, %v137
    %v140 = vsel %vm138, %v139, %v137
    %v141 = vclz %v140
    %v142 = vsub.s32 %v141, 2
    %vm143 = vcmp.gt.s32.totalorder 0, %v142
    %v144 = vsel %vm143, 0, %v142
    %v145 = vsub.s32 32, %v144
    %v146 = vshll.u32 %v137, %v144
    %v147 = vshrl.u32 %v129, %v145
    %v148 = vor.u32 %v146, %v147
    %v149 = vsub.s32 4294967266, %v144
    %v150 = vadd.s32 %v149, 127
    %v151 = vshll.u32 %v150, 23
    %v152 = vor.u32 4788187, %v151
    %v153 = vand.u32 2147483647, %v152
    %v155 = vcvt.s32.f32 %v148
    %v156 = vmul.f32 %v155, %v153
    %v157 = vxor.u32 %v156, 2147483648
    %v158 = vsel %vm75, %v157, %v156
    %v159 = vsub.s32 4, %v135
    %v160 = vsel %vm75, %v159, %v135
    %v161 = vsel %vm74, %v72, %v158
    %v162 = vsel %vm74, 0, %v160
    %v163 = vcosq.f32.pop %v161
    %v164 = vsinq.f32.pop %v161
    %vm165 = vweird.f32 %v72
    %v166 = vand.u32 %v162, 3
    %vm167 = vcmp.lt.s32.totalorder %v166, 2
    %vm168 = vcmp.eq.s32.totalorder %v166, 0
    %v169 = vxor.u32 %v164, 2147483648
    %v170 = vsel %vm168, %v163, %v169
    %vm171 = vcmp.eq.s32.totalorder %v166, 2
    %v172 = vxor.u32 %v163, 2147483648
    %v173 = vsel %vm171, %v172, %v164
    %v174 = vsel %vm167, %v170, %v173
    %v175 = vsel %vm165, nan, %v174
    %v176 = vand.u32 2147483647, %v72
    %vm177 = vcmp.le.f32.partialorder %v176, 0.7853982
    %vm178 = vcmp.lt.s32.totalorder %v72, 0
    %v179 = vand.u32 %v72, 2139095040
    %v180 = vshrl.u32 %v179, 23
    %v181 = vsub.s32 %v180, 127
    %v182 = vand.u32 2147483647, %v72
    %v183 = vand.u32 %v182, 8388607
    %v184 = vor.u32 %v183, 8388608
    %v185 = vsub.s32 0, %v184
    %v186 = vadd.s32 %v181, 1
    %vm187 = vcmp.gt.s32.totalorder %v186, 0
    %v188 = vsel %vm187, %v186, 0
    %v189 = vshrl.u32 %v188, 5
    %v190 = vand.u32 %v188, 31
    %v191 = vsub.s32 32, %v190
    %v192 = vshrl.u32 683565275, %v191
    %v193 = vshll.u32 683565275, %v190
    %v194 = vshrl.u32 2475754826, %v191
    %v195 = vor.u32 %v193, %v194
    %v196 = vshll.u32 2475754826, %v190
    %v197 = vshrl.u32 2131351028, %v191
    %v198 = vor.u32 %v196, %v197
    %v199 = vshll.u32 2131351028, %v190
    %v200 = vshrl.u32 2102212464, %v191
    %v201 = vor.u32 %v199, %v200
    %v202 = vshll.u32 2102212464, %v190
    %v203 = vshrl.u32 920167782, %v191
    %v204 = vor.u32 %v202, %v203
    %v205 = vshll.u32 920167782, %v190
    %v206 = vshrl.u32 1326507024, %v191
    %v207 = vor.u32 %v205, %v206
    %vm208 = vcmp.lt.s32.totalorder %v189, 1
    %vm209 = vcmp.lt.s32.totalorder %v189, 2
    %vm210 = vcmp.lt.s32.totalorder %v189, 3
    %vm211 = vcmp.lt.s32.totalorder %v189, 4
    %v212 = vsel %vm208, %v192, %v195
    %v213 = vsel %vm211, %v201, 2102212464
    %v214 = vsel %vm210, %v198, %v213
    %v215 = vsel %vm209, %v212, %v214
    %v216 = vsel %vm208, %v195, %v198
    %v217 = vsel %vm211, %v204, 920167782
    %v218 = vsel %vm210, %v201, %v217
    %v219 = vsel %vm209, %v216, %v218
    %v220 = vsel %vm208, %v198, %v201
    %v221 = vsel %vm211, %v207, 1326507024
    %v222 = vsel %vm210, %v204, %v221
    %v223 = vsel %vm209, %v220, %v222
    %v224 = vshll.u32 %v184, 8
    %v225 = vmul.u32.u64.compose %v224, %v223
    %v226 = vextract.low.u32 %v225
    %v227 = vextract.high.u32 %v225
    %v228 = vmul.u32.u64.compose %v224, %v219
    %v229 = vextract.low.u32 %v228
    %v230 = vextract.high.u32 %v228
    %v231 = vmul.u32 %v224, %v215
    %v232 = vadd.s32 %v227, %v229
    %vm233 = vc.u32 %v227, %v229
    %v234 = vadd.s32 %v230, 1
    %v235 = vsel %vm233, %v234, %v230
    %v236 = vadd.s32 %v231, %v235
    %v237 = vadd.s32 %v236, 536870912
    %v238 = vshrl.u32 %v237, 30
    %v239 = vshll.u32 %v238, 30
    %v240 = vsub.s32 %v236, %v239
    %vm241 = vcmp.lt.s32.totalorder %v240, 0
    %v242 = vsub.s32 0, %v240
    %v243 = vsel %vm241, %v242, %v240
    %v244 = vclz %v243
    %v245 = vsub.s32 %v244, 2
    %vm246 = vcmp.gt.s32.totalorder 0, %v245
    %v247 = vsel %vm246, 0, %v245
    %v248 = vsub.s32 32, %v247
    %v249 = vshll.u32 %v240, %v247
    %v250 = vshrl.u32 %v232, %v248
    %v251 = vor.u32 %v249, %v250
    %v252 = vsub.s32 4294967266, %v247
    %v253 = vadd.s32 %v252, 127
    %v254 = vshll.u32 %v253, 23
    %v255 = vor.u32 4788187, %v254
    %v256 = vand.u32 2147483647, %v255
    %v258 = vcvt.s32.f32 %v251
    %v259 = vmul.f32 %v258, %v256
    %v260 = vxor.u32 %v259, 2147483648
    %v261 = vsel %vm178, %v260, %v259
    %v262 = vsub.s32 4, %v238
    %v263 = vsel %vm178, %v262, %v238
    %v264 = vsel %vm177, %v72, %v261
    %v265 = vsel %vm177, 0, %v263
    %v266 = vcosq.f32.pop %v264
    %v267 = vsinq.f32.pop %v264
    %vm268 = vweird.f32 %v72
    %v269 = vadd.s32 %v265, 3
    %v270 = vand.u32 %v269, 3
    %vm271 = vcmp.lt.s32.totalorder %v270, 2
    %vm272 = vcmp.eq.s32.totalorder %v270, 0
    %v273 = vxor.u32 %v267, 2147483648
    %v274 = vsel %vm272, %v266, %v273
    %vm275 = vcmp.eq.s32.totalorder %v270, 2
    %v276 = vxor.u32 %v266, 2147483648
    %v277 = vsel %vm275, %v276, %v267
    %v278 = vsel %vm271, %v274, %v277
    %v279 = vsel %vm268, nan, %v278
    %v280 = vld [vmem:[#allocation5] sm:$0xff]
    %v281 = vld [vmem:[#allocation5 + $0x8] sm:$0xff]
    %v282 = vld [vmem:[#allocation5 + $0x10] sm:$0xff]
    %v283 = vld [vmem:[#allocation5 + $0x18] sm:$0xff]
    %v284 = vld [vmem:[#allocation5 + $0x20] sm:$0xff]
    %v285 = vld [vmem:[#allocation5 + $0x28] sm:$0xff]
    %v286 = vld [vmem:[#allocation5 + $0x30] sm:$0xff]
    %v287 = vld [vmem:[#allocation5 + $0x38] sm:$0xff]
    %v288 = vld [vmem:[#allocation5 + $0x40] sm:$0xff]
    %v289 = vld [vmem:[#allocation5 + $0x48] sm:$0xff]
    %v290 = vld [vmem:[#allocation5 + $0x50] sm:$0xff]
    %v291 = vld [vmem:[#allocation5 + $0x58] sm:$0xff]
    %v292 = vld [vmem:[#allocation5 + $0x60] sm:$0xff]
    %v293 = vld [vmem:[#allocation5 + $0x68] sm:$0xff]
    %v294 = vld [vmem:[#allocation5 + $0x70] sm:$0xff]
    %v295 = vld [vmem:[#allocation5 + $0x78] sm:$0xff]
    %v296 = vld [vmem:[#allocation5 + $0x80] sm:$0xff]
    %v297 = vld [vmem:[#allocation5 + $0x88] sm:$0xff]
    %v298 = vld [vmem:[#allocation5 + $0x90] sm:$0xff]
    %v299 = vld [vmem:[#allocation5 + $0x98] sm:$0xff]
    %v300 = vld [vmem:[#allocation5 + $0xa0] sm:$0xff]
    %v301 = vld [vmem:[#allocation5 + $0xa8] sm:$0xff]
    %v302 = vld [vmem:[#allocation5 + $0xb0] sm:$0xff]
    %v303 = vld [vmem:[#allocation5 + $0xb8] sm:$0xff]
    %v304 = vld [vmem:[#allocation5 + $0xc0] sm:$0xff]
    %v305 = vld [vmem:[#allocation5 + $0xc8] sm:$0xff]
    %v306 = vld [vmem:[#allocation5 + $0xd0] sm:$0xff]
    %v307 = vld [vmem:[#allocation5 + $0xd8] sm:$0xff]
    %v308 = vld [vmem:[#allocation5 + $0xe0] sm:$0xff]
    %v309 = vld [vmem:[#allocation5 + $0xe8] sm:$0xff]
    %v310 = vld [vmem:[#allocation5 + $0xf0] sm:$0xff]
    %v311 = vld [vmem:[#allocation5 + $0xf8] sm:$0xff]
    %v312 = vld [vmem:[#allocation5 + $0x100] sm:$0xff]
    %v313 = vld [vmem:[#allocation5 + $0x108] sm:$0xff]
    %v314 = vld [vmem:[#allocation5 + $0x110] sm:$0xff]
    %v315 = vld [vmem:[#allocation5 + $0x118] sm:$0xff]
    %v316 = vld [vmem:[#allocation5 + $0x120] sm:$0xff]
    %v317 = vld [vmem:[#allocation5 + $0x128] sm:$0xff]
    %v318 = vld [vmem:[#allocation5 + $0x130] sm:$0xff]
    %v319 = vld [vmem:[#allocation5 + $0x138] sm:$0xff]
    %v320 = vld [vmem:[#allocation5 + $0x140] sm:$0xff]
    %v321 = vld [vmem:[#allocation5 + $0x148] sm:$0xff]
    %v322 = vld [vmem:[#allocation5 + $0x150] sm:$0xff]
    %v323 = vld [vmem:[#allocation5 + $0x158] sm:$0xff]
    %v324 = vld [vmem:[#allocation5 + $0x160] sm:$0xff]
    %v325 = vld [vmem:[#allocation5 + $0x168] sm:$0xff]
    %v326 = vld [vmem:[#allocation5 + $0x170] sm:$0xff]
    %v327 = vld [vmem:[#allocation5 + $0x178] sm:$0xff]
    %v328 = vld [vmem:[#allocation5 + $0x180] sm:$0xff]
    %v329 = vld [vmem:[#allocation5 + $0x188] sm:$0xff]
    %v330 = vld [vmem:[#allocation5 + $0x190] sm:$0xff]
    %v331 = vld [vmem:[#allocation5 + $0x198] sm:$0xff]
    %v332 = vld [vmem:[#allocation5 + $0x1a0] sm:$0xff]
    %v333 = vld [vmem:[#allocation5 + $0x1a8] sm:$0xff]
    %v334 = vld [vmem:[#allocation5 + $0x1b0] sm:$0xff]
    %v335 = vld [vmem:[#allocation5 + $0x1b8] sm:$0xff]
    %v336 = vld [vmem:[#allocation5 + $0x1c0] sm:$0xff]
    %v337 = vld [vmem:[#allocation5 + $0x1c8] sm:$0xff]
    %v338 = vld [vmem:[#allocation5 + $0x1d0] sm:$0xff]
    %v339 = vld [vmem:[#allocation5 + $0x1d8] sm:$0xff]
    %v340 = vld [vmem:[#allocation5 + $0x1e0] sm:$0xff]
    %v341 = vld [vmem:[#allocation5 + $0x1e8] sm:$0xff]
    %v342 = vld [vmem:[#allocation5 + $0x1f0] sm:$0xff]
    %v343 = vld [vmem:[#allocation5 + $0x1f8] sm:$0xff]
    %v344 = vld [vmem:[#allocation5 + $0x200] sm:$0xff]
    %v345 = vld [vmem:[#allocation5 + $0x208] sm:$0xff]
    %v346 = vld [vmem:[#allocation5 + $0x210] sm:$0xff]
    %v347 = vld [vmem:[#allocation5 + $0x218] sm:$0xff]
    %v348 = vld [vmem:[#allocation5 + $0x220] sm:$0xff]
    %v349 = vld [vmem:[#allocation5 + $0x228] sm:$0xff]
    %v350 = vld [vmem:[#allocation5 + $0x230] sm:$0xff]
    %v351 = vld [vmem:[#allocation5 + $0x238] sm:$0xff]
    %v352 = vld [vmem:[#allocation5 + $0x240] sm:$0xff]
    %v353 = vld [vmem:[#allocation5 + $0x248] sm:$0xff]
    %v354 = vld [vmem:[#allocation5 + $0x250] sm:$0xff]
    %v355 = vld [vmem:[#allocation5 + $0x258] sm:$0xff]
    %v356 = vld [vmem:[#allocation5 + $0x260] sm:$0xff]
    %v357 = vld [vmem:[#allocation5 + $0x268] sm:$0xff]
    %v358 = vld [vmem:[#allocation5 + $0x270] sm:$0xff]
    %v359 = vld [vmem:[#allocation5 + $0x278] sm:$0xff]
    %v360 = vld [vmem:[#allocation5 + $0x280] sm:$0xff]
    %v361 = vld [vmem:[#allocation5 + $0x288] sm:$0xff]
    %v362 = vld [vmem:[#allocation5 + $0x290] sm:$0xff]
    %v363 = vld [vmem:[#allocation5 + $0x298] sm:$0xff]
    %v364 = vld [vmem:[#allocation5 + $0x2a0] sm:$0xff]
    %v365 = vld [vmem:[#allocation5 + $0x2a8] sm:$0xff]
    %v366 = vld [vmem:[#allocation5 + $0x2b0] sm:$0xff]
    %v367 = vld [vmem:[#allocation5 + $0x2b8] sm:$0xff]
    %v368 = vld [vmem:[#allocation5 + $0x2c0] sm:$0xff]
    %v369 = vld [vmem:[#allocation5 + $0x2c8] sm:$0xff]
    %v370 = vld [vmem:[#allocation5 + $0x2d0] sm:$0xff]
    %v371 = vld [vmem:[#allocation5 + $0x2d8] sm:$0xff]
    %v372 = vld [vmem:[#allocation5 + $0x2e0] sm:$0xff]
    %v373 = vld [vmem:[#allocation5 + $0x2e8] sm:$0xff]
    %v374 = vld [vmem:[#allocation5 + $0x2f0] sm:$0xff]
    %v375 = vld [vmem:[#allocation5 + $0x2f8] sm:$0xff]
    %v376 = vld [vmem:[#allocation5 + $0x300] sm:$0xff]
    %v377 = vld [vmem:[#allocation5 + $0x308] sm:$0xff]
    %v378 = vld [vmem:[#allocation5 + $0x310] sm:$0xff]
    %v379 = vld [vmem:[#allocation5 + $0x318] sm:$0xff]
    %v380 = vld [vmem:[#allocation5 + $0x320] sm:$0xff]
    %v381 = vld [vmem:[#allocation5 + $0x328] sm:$0xff]
    %v382 = vld [vmem:[#allocation5 + $0x330] sm:$0xff]
    %v383 = vld [vmem:[#allocation5 + $0x338] sm:$0xff]
    %v384 = vld [vmem:[#allocation5 + $0x340] sm:$0xff]
    %v385 = vld [vmem:[#allocation5 + $0x348] sm:$0xff]
    %v386 = vld [vmem:[#allocation5 + $0x350] sm:$0xff]
    %v387 = vld [vmem:[#allocation5 + $0x358] sm:$0xff]
    %v388 = vld [vmem:[#allocation5 + $0x360] sm:$0xff]
    %v389 = vld [vmem:[#allocation5 + $0x368] sm:$0xff]
    %v390 = vld [vmem:[#allocation5 + $0x370] sm:$0xff]
    %v391 = vld [vmem:[#allocation5 + $0x378] sm:$0xff]
    %v392 = vld [vmem:[#allocation5 + $0x380] sm:$0xff]
    %v393 = vld [vmem:[#allocation5 + $0x388] sm:$0xff]
    %v394 = vld [vmem:[#allocation5 + $0x390] sm:$0xff]
    %v395 = vld [vmem:[#allocation5 + $0x398] sm:$0xff]
    %v396 = vld [vmem:[#allocation5 + $0x3a0] sm:$0xff]
    %v397 = vld [vmem:[#allocation5 + $0x3a8] sm:$0xff]
    %v398 = vld [vmem:[#allocation5 + $0x3b0] sm:$0xff]
    %v399 = vld [vmem:[#allocation5 + $0x3b8] sm:$0xff]
    %v400 = vld [vmem:[#allocation5 + $0x3c0] sm:$0xff]
    %v401 = vld [vmem:[#allocation5 + $0x3c8] sm:$0xff]
    %v402 = vld [vmem:[#allocation5 + $0x3d0] sm:$0xff]
    %v403 = vld [vmem:[#allocation5 + $0x3d8] sm:$0xff]
    %v404 = vld [vmem:[#allocation5 + $0x3e0] sm:$0xff]
    %v405 = vld [vmem:[#allocation5 + $0x3e8] sm:$0xff]
    %v406 = vld [vmem:[#allocation5 + $0x3f0] sm:$0xff]
    %v407 = vld [vmem:[#allocation5 + $0x3f8] sm:$0xff]
    %v408 = vld [vmem:[#allocation5 + $0x400] sm:$0xff]
    %v409 = vld [vmem:[#allocation5 + $0x408] sm:$0xff]
    %v410 = vld [vmem:[#allocation5 + $0x410] sm:$0xff]
    %v411 = vld [vmem:[#allocation5 + $0x418] sm:$0xff]
    %v412 = vld [vmem:[#allocation5 + $0x420] sm:$0xff]
    %v413 = vld [vmem:[#allocation5 + $0x428] sm:$0xff]
    %v414 = vld [vmem:[#allocation5 + $0x430] sm:$0xff]
    %v415 = vld [vmem:[#allocation5 + $0x438] sm:$0xff]
    %v416 = vld [vmem:[#allocation5 + $0x440] sm:$0xff]
    %v417 = vld [vmem:[#allocation5 + $0x448] sm:$0xff]
    %v418 = vld [vmem:[#allocation5 + $0x450] sm:$0xff]
    %v419 = vld [vmem:[#allocation5 + $0x458] sm:$0xff]
    %v420 = vld [vmem:[#allocation5 + $0x460] sm:$0xff]
    %v421 = vld [vmem:[#allocation5 + $0x468] sm:$0xff]
    %v422 = vld [vmem:[#allocation5 + $0x470] sm:$0xff]
    %v423 = vld [vmem:[#allocation5 + $0x478] sm:$0xff]
    %v424 = vld [vmem:[#allocation5 + $0x480] sm:$0xff]
    %v425 = vld [vmem:[#allocation5 + $0x488] sm:$0xff]
    %v426 = vld [vmem:[#allocation5 + $0x490] sm:$0xff]
    %v427 = vld [vmem:[#allocation5 + $0x498] sm:$0xff]
    %v428 = vld [vmem:[#allocation5 + $0x4a0] sm:$0xff]
    %v429 = vld [vmem:[#allocation5 + $0x4a8] sm:$0xff]
    %v430 = vld [vmem:[#allocation5 + $0x4b0] sm:$0xff]
    %v431 = vld [vmem:[#allocation5 + $0x4b8] sm:$0xff]
    %v432 = vld [vmem:[#allocation5 + $0x4c0] sm:$0xff]
    %v433 = vld [vmem:[#allocation5 + $0x4c8] sm:$0xff]
    %v434 = vld [vmem:[#allocation5 + $0x4d0] sm:$0xff]
    %v435 = vld [vmem:[#allocation5 + $0x4d8] sm:$0xff]
    %v436 = vld [vmem:[#allocation5 + $0x4e0] sm:$0xff]
    %v437 = vld [vmem:[#allocation5 + $0x4e8] sm:$0xff]
    %v438 = vld [vmem:[#allocation5 + $0x4f0] sm:$0xff]
    %v439 = vld [vmem:[#allocation5 + $0x4f8] sm:$0xff]
    %v440 = vld [vmem:[#allocation5 + $0x500] sm:$0xff]
    %v441 = vld [vmem:[#allocation5 + $0x508] sm:$0xff]
    %v442 = vld [vmem:[#allocation5 + $0x510] sm:$0xff]
    %v443 = vld [vmem:[#allocation5 + $0x518] sm:$0xff]
    %v444 = vld [vmem:[#allocation5 + $0x520] sm:$0xff]
    %v445 = vld [vmem:[#allocation5 + $0x528] sm:$0xff]
    %v446 = vld [vmem:[#allocation5 + $0x530] sm:$0xff]
    %v447 = vld [vmem:[#allocation5 + $0x538] sm:$0xff]
    %v448 = vld [vmem:[#allocation5 + $0x540] sm:$0xff]
    %v449 = vld [vmem:[#allocation5 + $0x548] sm:$0xff]
    %v450 = vld [vmem:[#allocation5 + $0x550] sm:$0xff]
    %v451 = vld [vmem:[#allocation5 + $0x558] sm:$0xff]
    %v452 = vld [vmem:[#allocation5 + $0x560] sm:$0xff]
    %v453 = vld [vmem:[#allocation5 + $0x568] sm:$0xff]
    %v454 = vld [vmem:[#allocation5 + $0x570] sm:$0xff]
    %v455 = vld [vmem:[#allocation5 + $0x578] sm:$0xff]
    %v456 = vld [vmem:[#allocation5 + $0x580] sm:$0xff]
    %v457 = vld [vmem:[#allocation5 + $0x588] sm:$0xff]
    %v458 = vld [vmem:[#allocation5 + $0x590] sm:$0xff]
    %v459 = vld [vmem:[#allocation5 + $0x598] sm:$0xff]
    %v460 = vld [vmem:[#allocation5 + $0x5a0] sm:$0xff]
    %v461 = vld [vmem:[#allocation5 + $0x5a8] sm:$0xff]
    %v462 = vld [vmem:[#allocation5 + $0x5b0] sm:$0xff]
    %v463 = vld [vmem:[#allocation5 + $0x5b8] sm:$0xff]
    %v464 = vld [vmem:[#allocation5 + $0x5c0] sm:$0xff]
    %v465 = vld [vmem:[#allocation5 + $0x5c8] sm:$0xff]
    %v466 = vld [vmem:[#allocation5 + $0x5d0] sm:$0xff]
    %v467 = vld [vmem:[#allocation5 + $0x5d8] sm:$0xff]
    %v468 = vld [vmem:[#allocation5 + $0x5e0] sm:$0xff]
    %v469 = vld [vmem:[#allocation5 + $0x5e8] sm:$0xff]
    %v470 = vld [vmem:[#allocation5 + $0x5f0] sm:$0xff]
    %v471 = vld [vmem:[#allocation5 + $0x5f8] sm:$0xff]
    %v472 = vld [vmem:[#allocation5 + $0x600] sm:$0xff]
    %v473 = vld [vmem:[#allocation5 + $0x608] sm:$0xff]
    %v474 = vld [vmem:[#allocation5 + $0x610] sm:$0xff]
    %v475 = vld [vmem:[#allocation5 + $0x618] sm:$0xff]
    %v476 = vld [vmem:[#allocation5 + $0x620] sm:$0xff]
    %v477 = vld [vmem:[#allocation5 + $0x628] sm:$0xff]
    %v478 = vld [vmem:[#allocation5 + $0x630] sm:$0xff]
    %v479 = vld [vmem:[#allocation5 + $0x638] sm:$0xff]
    %v480 = vld [vmem:[#allocation5 + $0x640] sm:$0xff]
    %v481 = vld [vmem:[#allocation5 + $0x648] sm:$0xff]
    %v482 = vld [vmem:[#allocation5 + $0x650] sm:$0xff]
    %v483 = vld [vmem:[#allocation5 + $0x658] sm:$0xff]
    %v484 = vld [vmem:[#allocation5 + $0x660] sm:$0xff]
    %v485 = vld [vmem:[#allocation5 + $0x668] sm:$0xff]
    %v486 = vld [vmem:[#allocation5 + $0x670] sm:$0xff]
    %v487 = vld [vmem:[#allocation5 + $0x678] sm:$0xff]
    %v488 = vld [vmem:[#allocation5 + $0x680] sm:$0xff]
    %v489 = vld [vmem:[#allocation5 + $0x688] sm:$0xff]
    %v490 = vld [vmem:[#allocation5 + $0x690] sm:$0xff]
    %v491 = vld [vmem:[#allocation5 + $0x698] sm:$0xff]
    %v492 = vld [vmem:[#allocation5 + $0x6a0] sm:$0xff]
    %v493 = vld [vmem:[#allocation5 + $0x6a8] sm:$0xff]
    %v494 = vld [vmem:[#allocation5 + $0x6b0] sm:$0xff]
    %v495 = vld [vmem:[#allocation5 + $0x6b8] sm:$0xff]
    %v496 = vld [vmem:[#allocation5 + $0x6c0] sm:$0xff]
    %v497 = vld [vmem:[#allocation5 + $0x6c8] sm:$0xff]
    %v498 = vld [vmem:[#allocation5 + $0x6d0] sm:$0xff]
    %v499 = vld [vmem:[#allocation5 + $0x6d8] sm:$0xff]
    %v500 = vld [vmem:[#allocation5 + $0x6e0] sm:$0xff]
    %v501 = vld [vmem:[#allocation5 + $0x6e8] sm:$0xff]
    %v502 = vld [vmem:[#allocation5 + $0x6f0] sm:$0xff]
    %v503 = vld [vmem:[#allocation5 + $0x6f8] sm:$0xff]
    %v504 = vld [vmem:[#allocation5 + $0x700] sm:$0xff]
    %v505 = vld [vmem:[#allocation5 + $0x708] sm:$0xff]
    %v506 = vld [vmem:[#allocation5 + $0x710] sm:$0xff]
    %v507 = vld [vmem:[#allocation5 + $0x718] sm:$0xff]
    %v508 = vld [vmem:[#allocation5 + $0x720] sm:$0xff]
    %v509 = vld [vmem:[#allocation5 + $0x728] sm:$0xff]
    %v510 = vld [vmem:[#allocation5 + $0x730] sm:$0xff]
    %v511 = vld [vmem:[#allocation5 + $0x738] sm:$0xff]
    %v512 = vld [vmem:[#allocation5 + $0x740] sm:$0xff]
    %v513 = vld [vmem:[#allocation5 + $0x748] sm:$0xff]
    %v514 = vld [vmem:[#allocation5 + $0x750] sm:$0xff]
    %v515 = vld [vmem:[#allocation5 + $0x758] sm:$0xff]
    %v516 = vld [vmem:[#allocation5 + $0x760] sm:$0xff]
    %v517 = vld [vmem:[#allocation5 + $0x768] sm:$0xff]
    %v518 = vld [vmem:[#allocation5 + $0x770] sm:$0xff]
    %v519 = vld [vmem:[#allocation5 + $0x778] sm:$0xff]
    %v520 = vld [vmem:[#allocation5 + $0x780] sm:$0xff]
    %v521 = vld [vmem:[#allocation5 + $0x788] sm:$0xff]
    %v522 = vld [vmem:[#allocation5 + $0x790] sm:$0xff]
    %v523 = vld [vmem:[#allocation5 + $0x798] sm:$0xff]
    %v524 = vld [vmem:[#allocation5 + $0x7a0] sm:$0xff]
    %v525 = vld [vmem:[#allocation5 + $0x7a8] sm:$0xff]
    %v526 = vld [vmem:[#allocation5 + $0x7b0] sm:$0xff]
    %v527 = vld [vmem:[#allocation5 + $0x7b8] sm:$0xff]
    %v528 = vld [vmem:[#allocation5 + $0x7c0] sm:$0xff]
    %v529 = vld [vmem:[#allocation5 + $0x7c8] sm:$0xff]
    %v530 = vld [vmem:[#allocation5 + $0x7d0] sm:$0xff]
    %v531 = vld [vmem:[#allocation5 + $0x7d8] sm:$0xff]
    %v532 = vld [vmem:[#allocation5 + $0x7e0] sm:$0xff]
    %v533 = vld [vmem:[#allocation5 + $0x7e8] sm:$0xff]
    %v534 = vld [vmem:[#allocation5 + $0x7f0] sm:$0xff]
    %v535 = vld [vmem:[#allocation5 + $0x7f8] sm:$0xff]
    %v536 = vld [vmem:[#allocation5 + $0x800] sm:$0xff]
    %v537 = vld [vmem:[#allocation5 + $0x808] sm:$0xff]
    %v538 = vld [vmem:[#allocation5 + $0x810] sm:$0xff]
    %v539 = vld [vmem:[#allocation5 + $0x818] sm:$0xff]
    %v540 = vld [vmem:[#allocation5 + $0x820] sm:$0xff]
    %v541 = vld [vmem:[#allocation5 + $0x828] sm:$0xff]
    %v542 = vld [vmem:[#allocation5 + $0x830] sm:$0xff]
    %v543 = vld [vmem:[#allocation5 + $0x838] sm:$0xff]
    %v544 = vld [vmem:[#allocation5 + $0x840] sm:$0xff]
    %v545 = vld [vmem:[#allocation5 + $0x848] sm:$0xff]
    %v546 = vld [vmem:[#allocation5 + $0x850] sm:$0xff]
    %v547 = vld [vmem:[#allocation5 + $0x858] sm:$0xff]
    %v548 = vld [vmem:[#allocation5 + $0x860] sm:$0xff]
    %v549 = vld [vmem:[#allocation5 + $0x868] sm:$0xff]
    %v550 = vld [vmem:[#allocation5 + $0x870] sm:$0xff]
    %v551 = vld [vmem:[#allocation5 + $0x878] sm:$0xff]
    %v552 = vld [vmem:[#allocation5 + $0x880] sm:$0xff]
    %v553 = vld [vmem:[#allocation5 + $0x888] sm:$0xff]
    %v554 = vld [vmem:[#allocation5 + $0x890] sm:$0xff]
    %v555 = vld [vmem:[#allocation5 + $0x898] sm:$0xff]
    %v556 = vld [vmem:[#allocation5 + $0x8a0] sm:$0xff]
    %v557 = vld [vmem:[#allocation5 + $0x8a8] sm:$0xff]
    %v558 = vld [vmem:[#allocation5 + $0x8b0] sm:$0xff]
    %v559 = vld [vmem:[#allocation5 + $0x8b8] sm:$0xff]
    %v560 = vld [vmem:[#allocation5 + $0x8c0] sm:$0xff]
    %v561 = vld [vmem:[#allocation5 + $0x8c8] sm:$0xff]
    %v562 = vld [vmem:[#allocation5 + $0x8d0] sm:$0xff]
    %v563 = vld [vmem:[#allocation5 + $0x8d8] sm:$0xff]
    %v564 = vld [vmem:[#allocation5 + $0x8e0] sm:$0xff]
    %v565 = vld [vmem:[#allocation5 + $0x8e8] sm:$0xff]
    %v566 = vld [vmem:[#allocation5 + $0x8f0] sm:$0xff]
    %v567 = vld [vmem:[#allocation5 + $0x8f8] sm:$0xff]
    %v568 = vld [vmem:[#allocation5 + $0x900] sm:$0xff]
    %v569 = vld [vmem:[#allocation5 + $0x908] sm:$0xff]
    %v570 = vld [vmem:[#allocation5 + $0x910] sm:$0xff]
    %v571 = vld [vmem:[#allocation5 + $0x918] sm:$0xff]
    %v572 = vld [vmem:[#allocation5 + $0x920] sm:$0xff]
    %v573 = vld [vmem:[#allocation5 + $0x928] sm:$0xff]
    %v574 = vld [vmem:[#allocation5 + $0x930] sm:$0xff]
    %v575 = vld [vmem:[#allocation5 + $0x938] sm:$0xff]
    %v576 = vld [vmem:[#allocation5 + $0x940] sm:$0xff]
    %v577 = vld [vmem:[#allocation5 + $0x948] sm:$0xff]
    %v578 = vld [vmem:[#allocation5 + $0x950] sm:$0xff]
    %v579 = vld [vmem:[#allocation5 + $0x958] sm:$0xff]
    %v580 = vld [vmem:[#allocation5 + $0x960] sm:$0xff]
    %v581 = vld [vmem:[#allocation5 + $0x968] sm:$0xff]
    %v582 = vld [vmem:[#allocation5 + $0x970] sm:$0xff]
    %v583 = vld [vmem:[#allocation5 + $0x978] sm:$0xff]
    %v584 = vld [vmem:[#allocation5 + $0x980] sm:$0xff]
    %v585 = vld [vmem:[#allocation5 + $0x988] sm:$0xff]
    %v586 = vld [vmem:[#allocation5 + $0x990] sm:$0xff]
    %v587 = vld [vmem:[#allocation5 + $0x998] sm:$0xff]
    %v588 = vld [vmem:[#allocation5 + $0x9a0] sm:$0xff]
    %v589 = vld [vmem:[#allocation5 + $0x9a8] sm:$0xff]
    %v590 = vld [vmem:[#allocation5 + $0x9b0] sm:$0xff]
    %v591 = vld [vmem:[#allocation5 + $0x9b8] sm:$0xff]
    %v592 = vld [vmem:[#allocation5 + $0x9c0] sm:$0xff]
    %v593 = vld [vmem:[#allocation5 + $0x9c8] sm:$0xff]
    %v594 = vld [vmem:[#allocation5 + $0x9d0] sm:$0xff]
    %v595 = vld [vmem:[#allocation5 + $0x9d8] sm:$0xff]
    %v596 = vld [vmem:[#allocation5 + $0x9e0] sm:$0xff]
    %v597 = vld [vmem:[#allocation5 + $0x9e8] sm:$0xff]
    %v598 = vld [vmem:[#allocation5 + $0x9f0] sm:$0xff]
    %v599 = vld [vmem:[#allocation5 + $0x9f8] sm:$0xff]
    %v600 = vld [vmem:[#allocation5 + $0xa00] sm:$0xff]
    %v601 = vld [vmem:[#allocation5 + $0xa08] sm:$0xff]
    %v602 = vld [vmem:[#allocation5 + $0xa10] sm:$0xff]
    %v603 = vld [vmem:[#allocation5 + $0xa18] sm:$0xff]
    %v604 = vld [vmem:[#allocation5 + $0xa20] sm:$0xff]
    %v605 = vld [vmem:[#allocation5 + $0xa28] sm:$0xff]
    %v606 = vld [vmem:[#allocation5 + $0xa30] sm:$0xff]
    %v607 = vld [vmem:[#allocation5 + $0xa38] sm:$0xff]
    %v608 = vld [vmem:[#allocation5 + $0xa40] sm:$0xff]
    %v609 = vld [vmem:[#allocation5 + $0xa48] sm:$0xff]
    %v610 = vld [vmem:[#allocation5 + $0xa50] sm:$0xff]
    %v611 = vld [vmem:[#allocation5 + $0xa58] sm:$0xff]
    %v612 = vld [vmem:[#allocation5 + $0xa60] sm:$0xff]
    %v613 = vld [vmem:[#allocation5 + $0xa68] sm:$0xff]
    %v614 = vld [vmem:[#allocation5 + $0xa70] sm:$0xff]
    %v615 = vld [vmem:[#allocation5 + $0xa78] sm:$0xff]
    %v616 = vld [vmem:[#allocation5 + $0xa80] sm:$0xff]
    %v617 = vld [vmem:[#allocation5 + $0xa88] sm:$0xff]
    %v618 = vld [vmem:[#allocation5 + $0xa90] sm:$0xff]
    %v619 = vld [vmem:[#allocation5 + $0xa98] sm:$0xff]
    %v620 = vld [vmem:[#allocation5 + $0xaa0] sm:$0xff]
    %v621 = vld [vmem:[#allocation5 + $0xaa8] sm:$0xff]
    %v622 = vld [vmem:[#allocation5 + $0xab0] sm:$0xff]
    %v623 = vld [vmem:[#allocation5 + $0xab8] sm:$0xff]
    %v624 = vld [vmem:[#allocation5 + $0xac0] sm:$0xff]
    %v625 = vld [vmem:[#allocation5 + $0xac8] sm:$0xff]
    %v626 = vld [vmem:[#allocation5 + $0xad0] sm:$0xff]
    %v627 = vld [vmem:[#allocation5 + $0xad8] sm:$0xff]
    %v628 = vld [vmem:[#allocation5 + $0xae0] sm:$0xff]
    %v629 = vld [vmem:[#allocation5 + $0xae8] sm:$0xff]
    %v630 = vld [vmem:[#allocation5 + $0xaf0] sm:$0xff]
    %v631 = vld [vmem:[#allocation5 + $0xaf8] sm:$0xff]
    %v632 = vld [vmem:[#allocation5 + $0xb00] sm:$0xff]
    %v633 = vld [vmem:[#allocation5 + $0xb08] sm:$0xff]
    %v634 = vld [vmem:[#allocation5 + $0xb10] sm:$0xff]
    %v635 = vld [vmem:[#allocation5 + $0xb18] sm:$0xff]
    %v636 = vld [vmem:[#allocation5 + $0xb20] sm:$0xff]
    %v637 = vld [vmem:[#allocation5 + $0xb28] sm:$0xff]
    %v638 = vld [vmem:[#allocation5 + $0xb30] sm:$0xff]
    %v639 = vld [vmem:[#allocation5 + $0xb38] sm:$0xff]
    %v640 = vld [vmem:[#allocation5 + $0xb40] sm:$0xff]
    %v641 = vld [vmem:[#allocation5 + $0xb48] sm:$0xff]
    %v642 = vld [vmem:[#allocation5 + $0xb50] sm:$0xff]
    %v643 = vld [vmem:[#allocation5 + $0xb58] sm:$0xff]
    %v644 = vld [vmem:[#allocation5 + $0xb60] sm:$0xff]
    %v645 = vld [vmem:[#allocation5 + $0xb68] sm:$0xff]
    %v646 = vld [vmem:[#allocation5 + $0xb70] sm:$0xff]
    %v647 = vld [vmem:[#allocation5 + $0xb78] sm:$0xff]
    %v648 = vld [vmem:[#allocation5 + $0xb80] sm:$0xff]
    %v649 = vld [vmem:[#allocation5 + $0xb88] sm:$0xff]
    %v650 = vld [vmem:[#allocation5 + $0xb90] sm:$0xff]
    %v651 = vld [vmem:[#allocation5 + $0xb98] sm:$0xff]
    %v652 = vld [vmem:[#allocation5 + $0xba0] sm:$0xff]
    %v653 = vld [vmem:[#allocation5 + $0xba8] sm:$0xff]
    %v654 = vld [vmem:[#allocation5 + $0xbb0] sm:$0xff]
    %v655 = vld [vmem:[#allocation5 + $0xbb8] sm:$0xff]
    %v656 = vld [vmem:[#allocation5 + $0xbc0] sm:$0xff]
    %v657 = vld [vmem:[#allocation5 + $0xbc8] sm:$0xff]
    %v658 = vld [vmem:[#allocation5 + $0xbd0] sm:$0xff]
    %v659 = vld [vmem:[#allocation5 + $0xbd8] sm:$0xff]
    %v660 = vld [vmem:[#allocation5 + $0xbe0] sm:$0xff]
    %v661 = vld [vmem:[#allocation5 + $0xbe8] sm:$0xff]
    %v662 = vld [vmem:[#allocation5 + $0xbf0] sm:$0xff]
    %v663 = vld [vmem:[#allocation5 + $0xbf8] sm:$0xff]
    %v664 = vld [vmem:[#allocation5 + $0xc00] sm:$0xff]
    %v665 = vld [vmem:[#allocation5 + $0xc08] sm:$0xff]
    %v666 = vld [vmem:[#allocation5 + $0xc10] sm:$0xff]
    %v667 = vld [vmem:[#allocation5 + $0xc18] sm:$0xff]
    %v668 = vld [vmem:[#allocation5 + $0xc20] sm:$0xff]
    %v669 = vld [vmem:[#allocation5 + $0xc28] sm:$0xff]
    %v670 = vld [vmem:[#allocation5 + $0xc30] sm:$0xff]
    %v671 = vld [vmem:[#allocation5 + $0xc38] sm:$0xff]
    %v672 = vld [vmem:[#allocation5 + $0xc40] sm:$0xff]
    %v673 = vld [vmem:[#allocation5 + $0xc48] sm:$0xff]
    %v674 = vld [vmem:[#allocation5 + $0xc50] sm:$0xff]
    %v675 = vld [vmem:[#allocation5 + $0xc58] sm:$0xff]
    %v676 = vld [vmem:[#allocation5 + $0xc60] sm:$0xff]
    %v677 = vld [vmem:[#allocation5 + $0xc68] sm:$0xff]
    %v678 = vld [vmem:[#allocation5 + $0xc70] sm:$0xff]
    %v679 = vld [vmem:[#allocation5 + $0xc78] sm:$0xff]
    %v680 = vld [vmem:[#allocation5 + $0xc80] sm:$0xff]
    %v681 = vld [vmem:[#allocation5 + $0xc88] sm:$0xff]
    %v682 = vld [vmem:[#allocation5 + $0xc90] sm:$0xff]
    %v683 = vld [vmem:[#allocation5 + $0xc98] sm:$0xff]
    %v684 = vld [vmem:[#allocation5 + $0xca0] sm:$0xff]
    %v685 = vld [vmem:[#allocation5 + $0xca8] sm:$0xff]
    %v686 = vld [vmem:[#allocation5 + $0xcb0] sm:$0xff]
    %v687 = vld [vmem:[#allocation5 + $0xcb8] sm:$0xff]
    %v688 = vld [vmem:[#allocation5 + $0xcc0] sm:$0xff]
    %v689 = vld [vmem:[#allocation5 + $0xcc8] sm:$0xff]
    %v690 = vld [vmem:[#allocation5 + $0xcd0] sm:$0xff]
    %v691 = vld [vmem:[#allocation5 + $0xcd8] sm:$0xff]
    %v692 = vld [vmem:[#allocation5 + $0xce0] sm:$0xff]
    %v693 = vld [vmem:[#allocation5 + $0xce8] sm:$0xff]
    %v694 = vld [vmem:[#allocation5 + $0xcf0] sm:$0xff]
    %v695 = vld [vmem:[#allocation5 + $0xcf8] sm:$0xff]
    %v696 = vld [vmem:[#allocation5 + $0xd00] sm:$0xff]
    %v697 = vld [vmem:[#allocation5 + $0xd08] sm:$0xff]
    %v698 = vld [vmem:[#allocation5 + $0xd10] sm:$0xff]
    %v699 = vld [vmem:[#allocation5 + $0xd18] sm:$0xff]
    %v700 = vld [vmem:[#allocation5 + $0xd20] sm:$0xff]
    %v701 = vld [vmem:[#allocation5 + $0xd28] sm:$0xff]
    %v702 = vld [vmem:[#allocation5 + $0xd30] sm:$0xff]
    %v703 = vld [vmem:[#allocation5 + $0xd38] sm:$0xff]
    %v704 = vld [vmem:[#allocation5 + $0xd40] sm:$0xff]
    %v705 = vld [vmem:[#allocation5 + $0xd48] sm:$0xff]
    %v706 = vld [vmem:[#allocation5 + $0xd50] sm:$0xff]
    %v707 = vld [vmem:[#allocation5 + $0xd58] sm:$0xff]
    %v708 = vld [vmem:[#allocation5 + $0xd60] sm:$0xff]
    %v709 = vld [vmem:[#allocation5 + $0xd68] sm:$0xff]
    %v710 = vld [vmem:[#allocation5 + $0xd70] sm:$0xff]
    %v711 = vld [vmem:[#allocation5 + $0xd78] sm:$0xff]
    %v712 = vld [vmem:[#allocation5 + $0xd80] sm:$0xff]
    %v713 = vld [vmem:[#allocation5 + $0xd88] sm:$0xff]
    %v714 = vld [vmem:[#allocation5 + $0xd90] sm:$0xff]
    %v715 = vld [vmem:[#allocation5 + $0xd98] sm:$0xff]
    %v716 = vld [vmem:[#allocation5 + $0xda0] sm:$0xff]
    %v717 = vld [vmem:[#allocation5 + $0xda8] sm:$0xff]
    %v718 = vld [vmem:[#allocation5 + $0xdb0] sm:$0xff]
    %v719 = vld [vmem:[#allocation5 + $0xdb8] sm:$0xff]
    %v720 = vld [vmem:[#allocation5 + $0xdc0] sm:$0xff]
    %v721 = vld [vmem:[#allocation5 + $0xdc8] sm:$0xff]
    %v722 = vld [vmem:[#allocation5 + $0xdd0] sm:$0xff]
    %v723 = vld [vmem:[#allocation5 + $0xdd8] sm:$0xff]
    %v724 = vld [vmem:[#allocation5 + $0xde0] sm:$0xff]
    %v725 = vld [vmem:[#allocation5 + $0xde8] sm:$0xff]
    %v726 = vld [vmem:[#allocation5 + $0xdf0] sm:$0xff]
    %v727 = vld [vmem:[#allocation5 + $0xdf8] sm:$0xff]
    %v728 = vld [vmem:[#allocation5 + $0xe00] sm:$0xff]
    %v729 = vld [vmem:[#allocation5 + $0xe08] sm:$0xff]
    %v730 = vld [vmem:[#allocation5 + $0xe10] sm:$0xff]
    %v731 = vld [vmem:[#allocation5 + $0xe18] sm:$0xff]
    %v732 = vld [vmem:[#allocation5 + $0xe20] sm:$0xff]
    %v733 = vld [vmem:[#allocation5 + $0xe28] sm:$0xff]
    %v734 = vld [vmem:[#allocation5 + $0xe30] sm:$0xff]
    %v735 = vld [vmem:[#allocation5 + $0xe38] sm:$0xff]
    %v736 = vld [vmem:[#allocation5 + $0xe40] sm:$0xff]
    %v737 = vld [vmem:[#allocation5 + $0xe48] sm:$0xff]
    %v738 = vld [vmem:[#allocation5 + $0xe50] sm:$0xff]
    %v739 = vld [vmem:[#allocation5 + $0xe58] sm:$0xff]
    %v740 = vld [vmem:[#allocation5 + $0xe60] sm:$0xff]
    %v741 = vld [vmem:[#allocation5 + $0xe68] sm:$0xff]
    %v742 = vld [vmem:[#allocation5 + $0xe70] sm:$0xff]
    %v743 = vld [vmem:[#allocation5 + $0xe78] sm:$0xff]
    %v744 = vld [vmem:[#allocation5 + $0xe80] sm:$0xff]
    %v745 = vld [vmem:[#allocation5 + $0xe88] sm:$0xff]
    %v746 = vld [vmem:[#allocation5 + $0xe90] sm:$0xff]
    %v747 = vld [vmem:[#allocation5 + $0xe98] sm:$0xff]
    %v748 = vld [vmem:[#allocation5 + $0xea0] sm:$0xff]
    %v749 = vld [vmem:[#allocation5 + $0xea8] sm:$0xff]
    %v750 = vld [vmem:[#allocation5 + $0xeb0] sm:$0xff]
    %v751 = vld [vmem:[#allocation5 + $0xeb8] sm:$0xff]
    %v752 = vld [vmem:[#allocation5 + $0xec0] sm:$0xff]
    %v753 = vld [vmem:[#allocation5 + $0xec8] sm:$0xff]
    %v754 = vld [vmem:[#allocation5 + $0xed0] sm:$0xff]
    %v755 = vld [vmem:[#allocation5 + $0xed8] sm:$0xff]
    %v756 = vld [vmem:[#allocation5 + $0xee0] sm:$0xff]
    %v757 = vld [vmem:[#allocation5 + $0xee8] sm:$0xff]
    %v758 = vld [vmem:[#allocation5 + $0xef0] sm:$0xff]
    %v759 = vld [vmem:[#allocation5 + $0xef8] sm:$0xff]
    %v760 = vld [vmem:[#allocation5 + $0xf00] sm:$0xff]
    %v761 = vld [vmem:[#allocation5 + $0xf08] sm:$0xff]
    %v762 = vld [vmem:[#allocation5 + $0xf10] sm:$0xff]
    %v763 = vld [vmem:[#allocation5 + $0xf18] sm:$0xff]
    %v764 = vld [vmem:[#allocation5 + $0xf20] sm:$0xff]
    %v765 = vld [vmem:[#allocation5 + $0xf28] sm:$0xff]
    %v766 = vld [vmem:[#allocation5 + $0xf30] sm:$0xff]
    %v767 = vld [vmem:[#allocation5 + $0xf38] sm:$0xff]
    %v768 = vld [vmem:[#allocation5 + $0xf40] sm:$0xff]
    %v769 = vld [vmem:[#allocation5 + $0xf48] sm:$0xff]
    %v770 = vld [vmem:[#allocation5 + $0xf50] sm:$0xff]
    %v771 = vld [vmem:[#allocation5 + $0xf58] sm:$0xff]
    %v772 = vld [vmem:[#allocation5 + $0xf60] sm:$0xff]
    %v773 = vld [vmem:[#allocation5 + $0xf68] sm:$0xff]
    %v774 = vld [vmem:[#allocation5 + $0xf70] sm:$0xff]
    %v775 = vld [vmem:[#allocation5 + $0xf78] sm:$0xff]
    %v776 = vld [vmem:[#allocation5 + $0xf80] sm:$0xff]
    %v777 = vld [vmem:[#allocation5 + $0xf88] sm:$0xff]
    %v778 = vld [vmem:[#allocation5 + $0xf90] sm:$0xff]
    %v779 = vld [vmem:[#allocation5 + $0xf98] sm:$0xff]
    %v780 = vld [vmem:[#allocation5 + $0xfa0] sm:$0xff]
    %v781 = vld [vmem:[#allocation5 + $0xfa8] sm:$0xff]
    %v782 = vld [vmem:[#allocation5 + $0xfb0] sm:$0xff]
    %v783 = vld [vmem:[#allocation5 + $0xfb8] sm:$0xff]
    %v784 = vld [vmem:[#allocation5 + $0xfc0] sm:$0xff]
    %v785 = vld [vmem:[#allocation5 + $0xfc8] sm:$0xff]
    %v786 = vld [vmem:[#allocation5 + $0xfd0] sm:$0xff]
    %v787 = vld [vmem:[#allocation5 + $0xfd8] sm:$0xff]
    %v788 = vld [vmem:[#allocation5 + $0xfe0] sm:$0xff]
    %v789 = vld [vmem:[#allocation5 + $0xfe8] sm:$0xff]
    %v790 = vld [vmem:[#allocation5 + $0xff0] sm:$0xff]
    %v791 = vld [vmem:[#allocation5 + $0xff8] sm:$0xff]
    %792 = vmatprep.subr.mxu0 %v521
    %793 = vmatpush1.msra.mxu0 %v520
    %794 = vmatprep.subr.mxu0 %v505
    %795 = vmatpush1.msra.mxu0 %v504
    %796 = vmatprep.subr.mxu0 %v489
    %797 = vmatpush1.msra.mxu0 %v488
    %798 = vmatprep.subr.mxu0 %v473
    %799 = vmatpush1.msra.mxu0 %v472
    %800 = vmatprep.subr.mxu0 %v457
    %801 = vmatpush1.msra.mxu0 %v456
    %802 = vmatprep.subr.mxu0 %v441
    %803 = vmatpush1.msra.mxu0 %v440
    %804 = vmatprep.subr.mxu0 %v425
    %805 = vmatpush1.msra.mxu0 %v424
    %806 = vmatprep.subr.mxu0 %v409
    %807 = vmatpush1.msra.mxu0 %v408
    %808 = vmatprep.subr.mxu0 %v393
    %809 = vmatpush1.msra.mxu0 %v392
    %810 = vmatprep.subr.mxu0 %v377
    %811 = vmatpush1.msra.mxu0 %v376
    %812 = vmatprep.subr.mxu0 %v361
    %813 = vmatpush1.msra.mxu0 %v360
    %814 = vmatprep.subr.mxu0 %v345
    %815 = vmatpush1.msra.mxu0 %v344
    %816 = vmatprep.subr.mxu0 %v329
    %817 = vmatpush1.msra.mxu0 %v328
    %818 = vmatprep.subr.mxu0 %v313
    %819 = vmatpush1.msra.mxu0 %v312
    %820 = vmatprep.subr.mxu0 %v297
    %821 = vmatpush1.msra.mxu0 %v296
    %822 = vmatprep.subr.mxu0 %v281
    %823 = vmatpush1.msra.mxu0 %v280
    %824 = vmatprep.subr.mxu0 %v777
    %825 = vmatpush2.msra.mxu0 %v776
    %826 = vmatprep.subr.mxu0 %v761
    %827 = vmatpush2.msra.mxu0 %v760
    %828 = vmatprep.subr.mxu0 %v745
    %829 = vmatpush2.msra.mxu0 %v744
    %830 = vmatprep.subr.mxu0 %v729
    %831 = vmatpush2.msra.mxu0 %v728
    %832 = vmatprep.subr.mxu0 %v713
    %833 = vmatpush2.msra.mxu0 %v712
    %834 = vmatprep.subr.mxu0 %v697
    %835 = vmatpush2.msra.mxu0 %v696
    %836 = vmatprep.subr.mxu0 %v681
    %837 = vmatpush2.msra.mxu0 %v680
    %838 = vmatprep.subr.mxu0 %v665
    %839 = vmatpush2.msra.mxu0 %v664
    %840 = vmatprep.subr.mxu0 %v649
    %841 = vmatpush2.msra.mxu0 %v648
    %842 = vmatprep.subr.mxu0 %v633
    %843 = vmatpush2.msra.mxu0 %v632
    %844 = vmatprep.subr.mxu0 %v617
    %845 = vmatpush2.msra.mxu0 %v616
    %846 = vmatprep.subr.mxu0 %v601
    %847 = vmatpush2.msra.mxu0 %v600
    %848 = vmatprep.subr.mxu0 %v585
    %849 = vmatpush2.msra.mxu0 %v584
    %850 = vmatprep.subr.mxu0 %v569
    %851 = vmatpush2.msra.mxu0 %v568
    %852 = vmatprep.subr.mxu0 %v553
    %853 = vmatpush2.msra.mxu0 %v552
    %854 = vmatprep.subr.mxu0 %v537
    %855 = vmatpush2.msra.mxu0 %v536
    %856 = vmatprep.mubr.f32.mxu0 %v279
    %857 = vmatmul.mubr.f32.gmra.mxu0 %v175
    %v858 = vpop.f32.mrf.mxu0
    %v859 = vadd.f32 0.0, %v858
    %v860 = vpop.f32.mrf.mxu0
    %v861 = vadd.f32 0.0, %v860
    %862 = vdwg.mxu0
    %863 = vmatprep.subr.mxu0 %v523
    %864 = vmatpush1.msra.mxu0 %v522
    %865 = vmatprep.subr.mxu0 %v507
    %866 = vmatpush1.msra.mxu0 %v506
    %867 = vmatprep.subr.mxu0 %v491
    %868 = vmatpush1.msra.mxu0 %v490
    %869 = vmatprep.subr.mxu0 %v475
    %870 = vmatpush1.msra.mxu0 %v474
    %871 = vmatprep.subr.mxu0 %v459
    %872 = vmatpush1.msra.mxu0 %v458
    %873 = vmatprep.subr.mxu0 %v443
    %874 = vmatpush1.msra.mxu0 %v442
    %875 = vmatprep.subr.mxu0 %v427
    %876 = vmatpush1.msra.mxu0 %v426
    %877 = vmatprep.subr.mxu0 %v411
    %878 = vmatpush1.msra.mxu0 %v410
    %879 = vmatprep.subr.mxu0 %v395
    %880 = vmatpush1.msra.mxu0 %v394
    %881 = vmatprep.subr.mxu0 %v379
    %882 = vmatpush1.msra.mxu0 %v378
    %883 = vmatprep.subr.mxu0 %v363
    %884 = vmatpush1.msra.mxu0 %v362
    %885 = vmatprep.subr.mxu0 %v347
    %886 = vmatpush1.msra.mxu0 %v346
    %887 = vmatprep.subr.mxu0 %v331
    %888 = vmatpush1.msra.mxu0 %v330
    %889 = vmatprep.subr.mxu0 %v315
    %890 = vmatpush1.msra.mxu0 %v314
    %891 = vmatprep.subr.mxu0 %v299
    %892 = vmatpush1.msra.mxu0 %v298
    %893 = vmatprep.subr.mxu0 %v283
    %894 = vmatpush1.msra.mxu0 %v282
    %895 = vmatprep.subr.mxu0 %v779
    %896 = vmatpush2.msra.mxu0 %v778
    %897 = vmatprep.subr.mxu0 %v763
    %898 = vmatpush2.msra.mxu0 %v762
    %899 = vmatprep.subr.mxu0 %v747
    %900 = vmatpush2.msra.mxu0 %v746
    %901 = vmatprep.subr.mxu0 %v731
    %902 = vmatpush2.msra.mxu0 %v730
    %903 = vmatprep.subr.mxu0 %v715
    %904 = vmatpush2.msra.mxu0 %v714
    %905 = vmatprep.subr.mxu0 %v699
    %906 = vmatpush2.msra.mxu0 %v698
    %907 = vmatprep.subr.mxu0 %v683
    %908 = vmatpush2.msra.mxu0 %v682
    %909 = vmatprep.subr.mxu0 %v667
    %910 = vmatpush2.msra.mxu0 %v666
    %911 = vmatprep.subr.mxu0 %v651
    %912 = vmatpush2.msra.mxu0 %v650
    %913 = vmatprep.subr.mxu0 %v635
    %914 = vmatpush2.msra.mxu0 %v634
    %915 = vmatprep.subr.mxu0 %v619
    %916 = vmatpush2.msra.mxu0 %v618
    %917 = vmatprep.subr.mxu0 %v603
    %918 = vmatpush2.msra.mxu0 %v602
    %919 = vmatprep.subr.mxu0 %v587
    %920 = vmatpush2.msra.mxu0 %v586
    %921 = vmatprep.subr.mxu0 %v571
    %922 = vmatpush2.msra.mxu0 %v570
    %923 = vmatprep.subr.mxu0 %v555
    %924 = vmatpush2.msra.mxu0 %v554
    %925 = vmatprep.subr.mxu0 %v539
    %926 = vmatpush2.msra.mxu0 %v538
    %927 = vmatprep.mubr.f32.mxu0 %v279
    %928 = vmatmul.mubr.f32.gmra.mxu0 %v175
    %v929 = vpop.f32.mrf.mxu0
    %v930 = vadd.f32 0.0, %v929
    %v931 = vpop.f32.mrf.mxu0
    %v932 = vadd.f32 0.0, %v931
    %933 = vdwg.mxu0
    %934 = vmatprep.subr.mxu0 %v525
    %935 = vmatpush1.msra.mxu0 %v524
    %936 = vmatprep.subr.mxu0 %v509
    %937 = vmatpush1.msra.mxu0 %v508
    %938 = vmatprep.subr.mxu0 %v493
    %939 = vmatpush1.msra.mxu0 %v492
    %940 = vmatprep.subr.mxu0 %v477
    %941 = vmatpush1.msra.mxu0 %v476
    %942 = vmatprep.subr.mxu0 %v461
    %943 = vmatpush1.msra.mxu0 %v460
    %944 = vmatprep.subr.mxu0 %v445
    %945 = vmatpush1.msra.mxu0 %v444
    %946 = vmatprep.subr.mxu0 %v429
    %947 = vmatpush1.msra.mxu0 %v428
    %948 = vmatprep.subr.mxu0 %v413
    %949 = vmatpush1.msra.mxu0 %v412
    %950 = vmatprep.subr.mxu0 %v397
    %951 = vmatpush1.msra.mxu0 %v396
    %952 = vmatprep.subr.mxu0 %v381
    %953 = vmatpush1.msra.mxu0 %v380
    %954 = vmatprep.subr.mxu0 %v365
    %955 = vmatpush1.msra.mxu0 %v364
    %956 = vmatprep.subr.mxu0 %v349
    %957 = vmatpush1.msra.mxu0 %v348
    %958 = vmatprep.subr.mxu0 %v333
    %959 = vmatpush1.msra.mxu0 %v332
    %960 = vmatprep.subr.mxu0 %v317
    %961 = vmatpush1.msra.mxu0 %v316
    %962 = vmatprep.subr.mxu0 %v301
    %963 = vmatpush1.msra.mxu0 %v300
    %964 = vmatprep.subr.mxu0 %v285
    %965 = vmatpush1.msra.mxu0 %v284
    %966 = vmatprep.subr.mxu0 %v781
    %967 = vmatpush2.msra.mxu0 %v780
    %968 = vmatprep.subr.mxu0 %v765
    %969 = vmatpush2.msra.mxu0 %v764
    %970 = vmatprep.subr.mxu0 %v749
    %971 = vmatpush2.msra.mxu0 %v748
    %972 = vmatprep.subr.mxu0 %v733
    %973 = vmatpush2.msra.mxu0 %v732
    %974 = vmatprep.subr.mxu0 %v717
    %975 = vmatpush2.msra.mxu0 %v716
    %976 = vmatprep.subr.mxu0 %v701
    %977 = vmatpush2.msra.mxu0 %v700
    %978 = vmatprep.subr.mxu0 %v685
    %979 = vmatpush2.msra.mxu0 %v684
    %980 = vmatprep.subr.mxu0 %v669
    %981 = vmatpush2.msra.mxu0 %v668
    %982 = vmatprep.subr.mxu0 %v653
    %983 = vmatpush2.msra.mxu0 %v652
    %984 = vmatprep.subr.mxu0 %v637
    %985 = vmatpush2.msra.mxu0 %v636
    %986 = vmatprep.subr.mxu0 %v621
    %987 = vmatpush2.msra.mxu0 %v620
    %988 = vmatprep.subr.mxu0 %v605
    %989 = vmatpush2.msra.mxu0 %v604
    %990 = vmatprep.subr.mxu0 %v589
    %991 = vmatpush2.msra.mxu0 %v588
    %992 = vmatprep.subr.mxu0 %v573
    %993 = vmatpush2.msra.mxu0 %v572
    %994 = vmatprep.subr.mxu0 %v557
    %995 = vmatpush2.msra.mxu0 %v556
    %996 = vmatprep.subr.mxu0 %v541
    %997 = vmatpush2.msra.mxu0 %v540
    %998 = vmatprep.mubr.f32.mxu0 %v279
    %999 = vmatmul.mubr.f32.gmra.mxu0 %v175
    %v1000 = vpop.f32.mrf.mxu0
    %v1001 = vadd.f32 0.0, %v1000
    %v1002 = vpop.f32.mrf.mxu0
    %v1003 = vadd.f32 0.0, %v1002
    %1004 = vdwg.mxu0
    %1005 = vmatprep.subr.mxu0 %v527
    %1006 = vmatpush1.msra.mxu0 %v526
    %1007 = vmatprep.subr.mxu0 %v511
    %1008 = vmatpush1.msra.mxu0 %v510
    %1009 = vmatprep.subr.mxu0 %v495
    %1010 = vmatpush1.msra.mxu0 %v494
    %1011 = vmatprep.subr.mxu0 %v479
    %1012 = vmatpush1.msra.mxu0 %v478
    %1013 = vmatprep.subr.mxu0 %v463
    %1014 = vmatpush1.msra.mxu0 %v462
    %1015 = vmatprep.subr.mxu0 %v447
    %1016 = vmatpush1.msra.mxu0 %v446
    %1017 = vmatprep.subr.mxu0 %v431
    %1018 = vmatpush1.msra.mxu0 %v430
    %1019 = vmatprep.subr.mxu0 %v415
    %1020 = vmatpush1.msra.mxu0 %v414
    %1021 = vmatprep.subr.mxu0 %v399
    %1022 = vmatpush1.msra.mxu0 %v398
    %1023 = vmatprep.subr.mxu0 %v383
    %1024 = vmatpush1.msra.mxu0 %v382
    %1025 = vmatprep.subr.mxu0 %v367
    %1026 = vmatpush1.msra.mxu0 %v366
    %1027 = vmatprep.subr.mxu0 %v351
    %1028 = vmatpush1.msra.mxu0 %v350
    %1029 = vmatprep.subr.mxu0 %v335
    %1030 = vmatpush1.msra.mxu0 %v334
    %1031 = vmatprep.subr.mxu0 %v319
    %1032 = vmatpush1.msra.mxu0 %v318
    %1033 = vmatprep.subr.mxu0 %v303
    %1034 = vmatpush1.msra.mxu0 %v302
    %1035 = vmatprep.subr.mxu0 %v287
    %1036 = vmatpush1.msra.mxu0 %v286
    %1037 = vmatprep.subr.mxu0 %v783
    %1038 = vmatpush2.msra.mxu0 %v782
    %1039 = vmatprep.subr.mxu0 %v767
    %1040 = vmatpush2.msra.mxu0 %v766
    %1041 = vmatprep.subr.mxu0 %v751
    %1042 = vmatpush2.msra.mxu0 %v750
    %1043 = vmatprep.subr.mxu0 %v735
    %1044 = vmatpush2.msra.mxu0 %v734
    %1045 = vmatprep.subr.mxu0 %v719
    %1046 = vmatpush2.msra.mxu0 %v718
    %1047 = vmatprep.subr.mxu0 %v703
    %1048 = vmatpush2.msra.mxu0 %v702
    %1049 = vmatprep.subr.mxu0 %v687
    %1050 = vmatpush2.msra.mxu0 %v686
    %1051 = vmatprep.subr.mxu0 %v671
    %1052 = vmatpush2.msra.mxu0 %v670
    %1053 = vmatprep.subr.mxu0 %v655
    %1054 = vmatpush2.msra.mxu0 %v654
    %1055 = vmatprep.subr.mxu0 %v639
    %1056 = vmatpush2.msra.mxu0 %v638
    %1057 = vmatprep.subr.mxu0 %v623
    %1058 = vmatpush2.msra.mxu0 %v622
    %1059 = vmatprep.subr.mxu0 %v607
    %1060 = vmatpush2.msra.mxu0 %v606
    %1061 = vmatprep.subr.mxu0 %v591
    %1062 = vmatpush2.msra.mxu0 %v590
    %1063 = vmatprep.subr.mxu0 %v575
    %1064 = vmatpush2.msra.mxu0 %v574
    %1065 = vmatprep.subr.mxu0 %v559
    %1066 = vmatpush2.msra.mxu0 %v558
    %1067 = vmatprep.subr.mxu0 %v543
    %1068 = vmatpush2.msra.mxu0 %v542
    %1069 = vmatprep.mubr.f32.mxu0 %v279
    %1070 = vmatmul.mubr.f32.gmra.mxu0 %v175
    %v1071 = vpop.f32.mrf.mxu0
    %v1072 = vadd.f32 0.0, %v1071
    %v1073 = vpop.f32.mrf.mxu0
    %v1074 = vadd.f32 0.0, %v1073
    %1075 = vdwg.mxu0
    %1076 = vmatprep.subr.mxu0 %v529
    %1077 = vmatpush1.msra.mxu0 %v528
    %1078 = vmatprep.subr.mxu0 %v513
    %1079 = vmatpush1.msra.mxu0 %v512
    %1080 = vmatprep.subr.mxu0 %v497
    %1081 = vmatpush1.msra.mxu0 %v496
    %1082 = vmatprep.subr.mxu0 %v481
    %1083 = vmatpush1.msra.mxu0 %v480
    %1084 = vmatprep.subr.mxu0 %v465
    %1085 = vmatpush1.msra.mxu0 %v464
    %1086 = vmatprep.subr.mxu0 %v449
    %1087 = vmatpush1.msra.mxu0 %v448
    %1088 = vmatprep.subr.mxu0 %v433
    %1089 = vmatpush1.msra.mxu0 %v432
    %1090 = vmatprep.subr.mxu0 %v417
    %1091 = vmatpush1.msra.mxu0 %v416
    %1092 = vmatprep.subr.mxu0 %v401
    %1093 = vmatpush1.msra.mxu0 %v400
    %1094 = vmatprep.subr.mxu0 %v385
    %1095 = vmatpush1.msra.mxu0 %v384
    %1096 = vmatprep.subr.mxu0 %v369
    %1097 = vmatpush1.msra.mxu0 %v368
    %1098 = vmatprep.subr.mxu0 %v353
    %1099 = vmatpush1.msra.mxu0 %v352
    %1100 = vmatprep.subr.mxu0 %v337
    %1101 = vmatpush1.msra.mxu0 %v336
    %1102 = vmatprep.subr.mxu0 %v321
    %1103 = vmatpush1.msra.mxu0 %v320
    %1104 = vmatprep.subr.mxu0 %v305
    %1105 = vmatpush1.msra.mxu0 %v304
    %1106 = vmatprep.subr.mxu0 %v289
    %1107 = vmatpush1.msra.mxu0 %v288
    %1108 = vmatprep.subr.mxu0 %v785
    %1109 = vmatpush2.msra.mxu0 %v784
    %1110 = vmatprep.subr.mxu0 %v769
    %1111 = vmatpush2.msra.mxu0 %v768
    %1112 = vmatprep.subr.mxu0 %v753
    %1113 = vmatpush2.msra.mxu0 %v752
    %1114 = vmatprep.subr.mxu0 %v737
    %1115 = vmatpush2.msra.mxu0 %v736
    %1116 = vmatprep.subr.mxu0 %v721
    %1117 = vmatpush2.msra.mxu0 %v720
    %1118 = vmatprep.subr.mxu0 %v705
    %1119 = vmatpush2.msra.mxu0 %v704
    %1120 = vmatprep.subr.mxu0 %v689
    %1121 = vmatpush2.msra.mxu0 %v688
    %1122 = vmatprep.subr.mxu0 %v673
    %1123 = vmatpush2.msra.mxu0 %v672
    %1124 = vmatprep.subr.mxu0 %v657
    %1125 = vmatpush2.msra.mxu0 %v656
    %1126 = vmatprep.subr.mxu0 %v641
    %1127 = vmatpush2.msra.mxu0 %v640
    %1128 = vmatprep.subr.mxu0 %v625
    %1129 = vmatpush2.msra.mxu0 %v624
    %1130 = vmatprep.subr.mxu0 %v609
    %1131 = vmatpush2.msra.mxu0 %v608
    %1132 = vmatprep.subr.mxu0 %v593
    %1133 = vmatpush2.msra.mxu0 %v592
    %1134 = vmatprep.subr.mxu0 %v577
    %1135 = vmatpush2.msra.mxu0 %v576
    %1136 = vmatprep.subr.mxu0 %v561
    %1137 = vmatpush2.msra.mxu0 %v560
    %1138 = vmatprep.subr.mxu0 %v545
    %1139 = vmatpush2.msra.mxu0 %v544
    %1140 = vmatprep.mubr.f32.mxu0 %v279
    %1141 = vmatmul.mubr.f32.gmra.mxu0 %v175
    %v1142 = vpop.f32.mrf.mxu0
    %v1143 = vadd.f32 0.0, %v1142
    %v1144 = vpop.f32.mrf.mxu0
    %v1145 = vadd.f32 0.0, %v1144
    %1146 = vdwg.mxu0
    %1147 = vmatprep.subr.mxu0 %v531
    %1148 = vmatpush1.msra.mxu0 %v530
    %1149 = vmatprep.subr.mxu0 %v515
    %1150 = vmatpush1.msra.mxu0 %v514
    %1151 = vmatprep.subr.mxu0 %v499
    %1152 = vmatpush1.msra.mxu0 %v498
    %1153 = vmatprep.subr.mxu0 %v483
    %1154 = vmatpush1.msra.mxu0 %v482
    %1155 = vmatprep.subr.mxu0 %v467
    %1156 = vmatpush1.msra.mxu0 %v466
    %1157 = vmatprep.subr.mxu0 %v451
    %1158 = vmatpush1.msra.mxu0 %v450
    %1159 = vmatprep.subr.mxu0 %v435
    %1160 = vmatpush1.msra.mxu0 %v434
    %1161 = vmatprep.subr.mxu0 %v419
    %1162 = vmatpush1.msra.mxu0 %v418
    %1163 = vmatprep.subr.mxu0 %v403
    %1164 = vmatpush1.msra.mxu0 %v402
    %1165 = vmatprep.subr.mxu0 %v387
    %1166 = vmatpush1.msra.mxu0 %v386
    %1167 = vmatprep.subr.mxu0 %v371
    %1168 = vmatpush1.msra.mxu0 %v370
    %1169 = vmatprep.subr.mxu0 %v355
    %1170 = vmatpush1.msra.mxu0 %v354
    %1171 = vmatprep.subr.mxu0 %v339
    %1172 = vmatpush1.msra.mxu0 %v338
    %1173 = vmatprep.subr.mxu0 %v323
    %1174 = vmatpush1.msra.mxu0 %v322
    %1175 = vmatprep.subr.mxu0 %v307
    %1176 = vmatpush1.msra.mxu0 %v306
    %1177 = vmatprep.subr.mxu0 %v291
    %1178 = vmatpush1.msra.mxu0 %v290
    %1179 = vmatprep.subr.mxu0 %v787
    %1180 = vmatpush2.msra.mxu0 %v786
    %1181 = vmatprep.subr.mxu0 %v771
    %1182 = vmatpush2.msra.mxu0 %v770
    %1183 = vmatprep.subr.mxu0 %v755
    %1184 = vmatpush2.msra.mxu0 %v754
    %1185 = vmatprep.subr.mxu0 %v739
    %1186 = vmatpush2.msra.mxu0 %v738
    %1187 = vmatprep.subr.mxu0 %v723
    %1188 = vmatpush2.msra.mxu0 %v722
    %1189 = vmatprep.subr.mxu0 %v707
    %1190 = vmatpush2.msra.mxu0 %v706
    %1191 = vmatprep.subr.mxu0 %v691
    %1192 = vmatpush2.msra.mxu0 %v690
    %1193 = vmatprep.subr.mxu0 %v675
    %1194 = vmatpush2.msra.mxu0 %v674
    %1195 = vmatprep.subr.mxu0 %v659
    %1196 = vmatpush2.msra.mxu0 %v658
    %1197 = vmatprep.subr.mxu0 %v643
    %1198 = vmatpush2.msra.mxu0 %v642
    %1199 = vmatprep.subr.mxu0 %v627
    %1200 = vmatpush2.msra.mxu0 %v626
    %1201 = vmatprep.subr.mxu0 %v611
    %1202 = vmatpush2.msra.mxu0 %v610
    %1203 = vmatprep.subr.mxu0 %v595
    %1204 = vmatpush2.msra.mxu0 %v594
    %1205 = vmatprep.subr.mxu0 %v579
    %1206 = vmatpush2.msra.mxu0 %v578
    %1207 = vmatprep.subr.mxu0 %v563
    %1208 = vmatpush2.msra.mxu0 %v562
    %1209 = vmatprep.subr.mxu0 %v547
    %1210 = vmatpush2.msra.mxu0 %v546
    %1211 = vmatprep.mubr.f32.mxu0 %v279
    %1212 = vmatmul.mubr.f32.gmra.mxu0 %v175
    %v1213 = vpop.f32.mrf.mxu0
    %v1214 = vadd.f32 0.0, %v1213
    %v1215 = vpop.f32.mrf.mxu0
    %v1216 = vadd.f32 0.0, %v1215
    %1217 = vdwg.mxu0
    %1218 = vmatprep.subr.mxu0 %v533
    %1219 = vmatpush1.msra.mxu0 %v532
    %1220 = vmatprep.subr.mxu0 %v517
    %1221 = vmatpush1.msra.mxu0 %v516
    %1222 = vmatprep.subr.mxu0 %v501
    %1223 = vmatpush1.msra.mxu0 %v500
    %1224 = vmatprep.subr.mxu0 %v485
    %1225 = vmatpush1.msra.mxu0 %v484
    %1226 = vmatprep.subr.mxu0 %v469
    %1227 = vmatpush1.msra.mxu0 %v468
    %1228 = vmatprep.subr.mxu0 %v453
    %1229 = vmatpush1.msra.mxu0 %v452
    %1230 = vmatprep.subr.mxu0 %v437
    %1231 = vmatpush1.msra.mxu0 %v436
    %1232 = vmatprep.subr.mxu0 %v421
    %1233 = vmatpush1.msra.mxu0 %v420
    %1234 = vmatprep.subr.mxu0 %v405
    %1235 = vmatpush1.msra.mxu0 %v404
    %1236 = vmatprep.subr.mxu0 %v389
    %1237 = vmatpush1.msra.mxu0 %v388
    %1238 = vmatprep.subr.mxu0 %v373
    %1239 = vmatpush1.msra.mxu0 %v372
    %1240 = vmatprep.subr.mxu0 %v357
    %1241 = vmatpush1.msra.mxu0 %v356
    %1242 = vmatprep.subr.mxu0 %v341
    %1243 = vmatpush1.msra.mxu0 %v340
    %1244 = vmatprep.subr.mxu0 %v325
    %1245 = vmatpush1.msra.mxu0 %v324
    %1246 = vmatprep.subr.mxu0 %v309
    %1247 = vmatpush1.msra.mxu0 %v308
    %1248 = vmatprep.subr.mxu0 %v293
    %1249 = vmatpush1.msra.mxu0 %v292
    %1250 = vmatprep.subr.mxu0 %v789
    %1251 = vmatpush2.msra.mxu0 %v788
    %1252 = vmatprep.subr.mxu0 %v773
    %1253 = vmatpush2.msra.mxu0 %v772
    %1254 = vmatprep.subr.mxu0 %v757
    %1255 = vmatpush2.msra.mxu0 %v756
    %1256 = vmatprep.subr.mxu0 %v741
    %1257 = vmatpush2.msra.mxu0 %v740
    %1258 = vmatprep.subr.mxu0 %v725
    %1259 = vmatpush2.msra.mxu0 %v724
    %1260 = vmatprep.subr.mxu0 %v709
    %1261 = vmatpush2.msra.mxu0 %v708
    %1262 = vmatprep.subr.mxu0 %v693
    %1263 = vmatpush2.msra.mxu0 %v692
    %1264 = vmatprep.subr.mxu0 %v677
    %1265 = vmatpush2.msra.mxu0 %v676
    %1266 = vmatprep.subr.mxu0 %v661
    %1267 = vmatpush2.msra.mxu0 %v660
    %1268 = vmatprep.subr.mxu0 %v645
    %1269 = vmatpush2.msra.mxu0 %v644
    %1270 = vmatprep.subr.mxu0 %v629
    %1271 = vmatpush2.msra.mxu0 %v628
    %1272 = vmatprep.subr.mxu0 %v613
    %1273 = vmatpush2.msra.mxu0 %v612
    %1274 = vmatprep.subr.mxu0 %v597
    %1275 = vmatpush2.msra.mxu0 %v596
    %1276 = vmatprep.subr.mxu0 %v581
    %1277 = vmatpush2.msra.mxu0 %v580
    %1278 = vmatprep.subr.mxu0 %v565
    %1279 = vmatpush2.msra.mxu0 %v564
    %1280 = vmatprep.subr.mxu0 %v549
    %1281 = vmatpush2.msra.mxu0 %v548
    %1282 = vmatprep.mubr.f32.mxu0 %v279
    %1283 = vmatmul.mubr.f32.gmra.mxu0 %v175
    %v1284 = vpop.f32.mrf.mxu0
    %v1285 = vadd.f32 0.0, %v1284
    %v1286 = vpop.f32.mrf.mxu0
    %v1287 = vadd.f32 0.0, %v1286
    %1288 = vdwg.mxu0
    %1289 = vmatprep.subr.mxu0 %v535
    %1290 = vmatpush1.msra.mxu0 %v534
    %1291 = vmatprep.subr.mxu0 %v519
    %1292 = vmatpush1.msra.mxu0 %v518
    %1293 = vmatprep.subr.mxu0 %v503
    %1294 = vmatpush1.msra.mxu0 %v502
    %1295 = vmatprep.subr.mxu0 %v487
    %1296 = vmatpush1.msra.mxu0 %v486
    %1297 = vmatprep.subr.mxu0 %v471
    %1298 = vmatpush1.msra.mxu0 %v470
    %1299 = vmatprep.subr.mxu0 %v455
    %1300 = vmatpush1.msra.mxu0 %v454
    %1301 = vmatprep.subr.mxu0 %v439
    %1302 = vmatpush1.msra.mxu0 %v438
    %1303 = vmatprep.subr.mxu0 %v423
    %1304 = vmatpush1.msra.mxu0 %v422
    %1305 = vmatprep.subr.mxu0 %v407
    %1306 = vmatpush1.msra.mxu0 %v406
    %1307 = vmatprep.subr.mxu0 %v391
    %1308 = vmatpush1.msra.mxu0 %v390
    %1309 = vmatprep.subr.mxu0 %v375
    %1310 = vmatpush1.msra.mxu0 %v374
    %1311 = vmatprep.subr.mxu0 %v359
    %1312 = vmatpush1.msra.mxu0 %v358
    %1313 = vmatprep.subr.mxu0 %v343
    %1314 = vmatpush1.msra.mxu0 %v342
    %1315 = vmatprep.subr.mxu0 %v327
    %1316 = vmatpush1.msra.mxu0 %v326
    %1317 = vmatprep.subr.mxu0 %v311
    %1318 = vmatpush1.msra.mxu0 %v310
    %1319 = vmatprep.subr.mxu0 %v295
    %1320 = vmatpush1.msra.mxu0 %v294
    %1321 = vmatprep.subr.mxu0 %v791
    %1322 = vmatpush2.msra.mxu0 %v790
    %1323 = vmatprep.subr.mxu0 %v775
    %1324 = vmatpush2.msra.mxu0 %v774
    %1325 = vmatprep.subr.mxu0 %v759
    %1326 = vmatpush2.msra.mxu0 %v758
    %1327 = vmatprep.subr.mxu0 %v743
    %1328 = vmatpush2.msra.mxu0 %v742
    %1329 = vmatprep.subr.mxu0 %v727
    %1330 = vmatpush2.msra.mxu0 %v726
    %1331 = vmatprep.subr.mxu0 %v711
    %1332 = vmatpush2.msra.mxu0 %v710
    %1333 = vmatprep.subr.mxu0 %v695
    %1334 = vmatpush2.msra.mxu0 %v694
    %1335 = vmatprep.subr.mxu0 %v679
    %1336 = vmatpush2.msra.mxu0 %v678
    %1337 = vmatprep.subr.mxu0 %v663
    %1338 = vmatpush2.msra.mxu0 %v662
    %1339 = vmatprep.subr.mxu0 %v647
    %1340 = vmatpush2.msra.mxu0 %v646
    %1341 = vmatprep.subr.mxu0 %v631
    %1342 = vmatpush2.msra.mxu0 %v630
    %1343 = vmatprep.subr.mxu0 %v615
    %1344 = vmatpush2.msra.mxu0 %v614
    %1345 = vmatprep.subr.mxu0 %v599
    %1346 = vmatpush2.msra.mxu0 %v598
    %1347 = vmatprep.subr.mxu0 %v583
    %1348 = vmatpush2.msra.mxu0 %v582
    %1349 = vmatprep.subr.mxu0 %v567
    %1350 = vmatpush2.msra.mxu0 %v566
    %1351 = vmatprep.subr.mxu0 %v551
    %1352 = vmatpush2.msra.mxu0 %v550
    %1353 = vmatprep.mubr.f32.mxu0 %v279
    %1354 = vmatmul.mubr.f32.gmra.mxu0 %v175
    %v1355 = vpop.f32.mrf.mxu0
    %v1356 = vadd.f32 0.0, %v1355
    %v1357 = vpop.f32.mrf.mxu0
    %v1358 = vadd.f32 0.0, %v1357
    %1359 = vdwg.mxu0
    %v1360 = vmul.f32 %v859, %v1001
    %v1361 = vmul.f32 %v861, %v1003
    %v1362 = vmul.f32 %v930, %v1072
    %v1363 = vmul.f32 %v932, %v1074
    %v1364 = vmul.f32 %v1360, %v1143
    %v1365 = vmul.f32 %v1361, %v1145
    %v1366 = vmul.f32 %v1362, %v1214
    %v1367 = vmul.f32 %v1363, %v1216
    %v1368 = vmul.f32 %v1364, %v1285
    %v1369 = vmul.f32 %v1365, %v1287
    %v1370 = vmul.f32 %v1366, %v1356
    %v1371 = vmul.f32 %v1367, %v1358
    %v1372 = vld [vmem:[#allocation7] sm:$0xff]
    %v1373 = vld [vmem:[#allocation7 + $0x8] sm:$0xff]
    %v1374 = vld [vmem:[#allocation7 + $0x10] sm:$0xff]
    %v1375 = vld [vmem:[#allocation7 + $0x18] sm:$0xff]
    %v1376 = vld [vmem:[#allocation7 + $0x20] sm:$0xff]
    %v1377 = vld [vmem:[#allocation7 + $0x28] sm:$0xff]
    %v1378 = vld [vmem:[#allocation7 + $0x30] sm:$0xff]
    %v1379 = vld [vmem:[#allocation7 + $0x38] sm:$0xff]
    %v1380 = vld [vmem:[#allocation7 + $0x40] sm:$0xff]
    %v1381 = vld [vmem:[#allocation7 + $0x48] sm:$0xff]
    %v1382 = vld [vmem:[#allocation7 + $0x50] sm:$0xff]
    %v1383 = vld [vmem:[#allocation7 + $0x58] sm:$0xff]
    %v1384 = vld [vmem:[#allocation7 + $0x60] sm:$0xff]
    %v1385 = vld [vmem:[#allocation7 + $0x68] sm:$0xff]
    %v1386 = vld [vmem:[#allocation7 + $0x70] sm:$0xff]
    %v1387 = vld [vmem:[#allocation7 + $0x78] sm:$0xff]
    %v1388 = vld [vmem:[#allocation7 + $0x80] sm:$0xff]
    %v1389 = vld [vmem:[#allocation7 + $0x88] sm:$0xff]
    %v1390 = vld [vmem:[#allocation7 + $0x90] sm:$0xff]
    %v1391 = vld [vmem:[#allocation7 + $0x98] sm:$0xff]
    %v1392 = vld [vmem:[#allocation7 + $0xa0] sm:$0xff]
    %v1393 = vld [vmem:[#allocation7 + $0xa8] sm:$0xff]
    %v1394 = vld [vmem:[#allocation7 + $0xb0] sm:$0xff]
    %v1395 = vld [vmem:[#allocation7 + $0xb8] sm:$0xff]
    %v1396 = vld [vmem:[#allocation7 + $0xc0] sm:$0xff]
    %v1397 = vld [vmem:[#allocation7 + $0xc8] sm:$0xff]
    %v1398 = vld [vmem:[#allocation7 + $0xd0] sm:$0xff]
    %v1399 = vld [vmem:[#allocation7 + $0xd8] sm:$0xff]
    %v1400 = vld [vmem:[#allocation7 + $0xe0] sm:$0xff]
    %v1401 = vld [vmem:[#allocation7 + $0xe8] sm:$0xff]
    %v1402 = vld [vmem:[#allocation7 + $0xf0] sm:$0xff]
    %v1403 = vld [vmem:[#allocation7 + $0xf8] sm:$0xff]
    %v1404 = vld [vmem:[#allocation7 + $0x100] sm:$0xff]
    %v1405 = vld [vmem:[#allocation7 + $0x108] sm:$0xff]
    %v1406 = vld [vmem:[#allocation7 + $0x110] sm:$0xff]
    %v1407 = vld [vmem:[#allocation7 + $0x118] sm:$0xff]
    %v1408 = vld [vmem:[#allocation7 + $0x120] sm:$0xff]
    %v1409 = vld [vmem:[#allocation7 + $0x128] sm:$0xff]
    %v1410 = vld [vmem:[#allocation7 + $0x130] sm:$0xff]
    %v1411 = vld [vmem:[#allocation7 + $0x138] sm:$0xff]
    %v1412 = vld [vmem:[#allocation7 + $0x140] sm:$0xff]
    %v1413 = vld [vmem:[#allocation7 + $0x148] sm:$0xff]
    %v1414 = vld [vmem:[#allocation7 + $0x150] sm:$0xff]
    %v1415 = vld [vmem:[#allocation7 + $0x158] sm:$0xff]
    %v1416 = vld [vmem:[#allocation7 + $0x160] sm:$0xff]
    %v1417 = vld [vmem:[#allocation7 + $0x168] sm:$0xff]
    %v1418 = vld [vmem:[#allocation7 + $0x170] sm:$0xff]
    %v1419 = vld [vmem:[#allocation7 + $0x178] sm:$0xff]
    %v1420 = vld [vmem:[#allocation7 + $0x180] sm:$0xff]
    %v1421 = vld [vmem:[#allocation7 + $0x188] sm:$0xff]
    %v1422 = vld [vmem:[#allocation7 + $0x190] sm:$0xff]
    %v1423 = vld [vmem:[#allocation7 + $0x198] sm:$0xff]
    %v1424 = vld [vmem:[#allocation7 + $0x1a0] sm:$0xff]
    %v1425 = vld [vmem:[#allocation7 + $0x1a8] sm:$0xff]
    %v1426 = vld [vmem:[#allocation7 + $0x1b0] sm:$0xff]
    %v1427 = vld [vmem:[#allocation7 + $0x1b8] sm:$0xff]
    %v1428 = vld [vmem:[#allocation7 + $0x1c0] sm:$0xff]
    %v1429 = vld [vmem:[#allocation7 + $0x1c8] sm:$0xff]
    %v1430 = vld [vmem:[#allocation7 + $0x1d0] sm:$0xff]
    %v1431 = vld [vmem:[#allocation7 + $0x1d8] sm:$0xff]
    %v1432 = vld [vmem:[#allocation7 + $0x1e0] sm:$0xff]
    %v1433 = vld [vmem:[#allocation7 + $0x1e8] sm:$0xff]
    %v1434 = vld [vmem:[#allocation7 + $0x1f0] sm:$0xff]
    %v1435 = vld [vmem:[#allocation7 + $0x1f8] sm:$0xff]
    %v1436 = vld [vmem:[#allocation7 + $0x200] sm:$0xff]
    %v1437 = vld [vmem:[#allocation7 + $0x208] sm:$0xff]
    %v1438 = vld [vmem:[#allocation7 + $0x210] sm:$0xff]
    %v1439 = vld [vmem:[#allocation7 + $0x218] sm:$0xff]
    %v1440 = vld [vmem:[#allocation7 + $0x220] sm:$0xff]
    %v1441 = vld [vmem:[#allocation7 + $0x228] sm:$0xff]
    %v1442 = vld [vmem:[#allocation7 + $0x230] sm:$0xff]
    %v1443 = vld [vmem:[#allocation7 + $0x238] sm:$0xff]
    %v1444 = vld [vmem:[#allocation7 + $0x240] sm:$0xff]
    %v1445 = vld [vmem:[#allocation7 + $0x248] sm:$0xff]
    %v1446 = vld [vmem:[#allocation7 + $0x250] sm:$0xff]
    %v1447 = vld [vmem:[#allocation7 + $0x258] sm:$0xff]
    %v1448 = vld [vmem:[#allocation7 + $0x260] sm:$0xff]
    %v1449 = vld [vmem:[#allocation7 + $0x268] sm:$0xff]
    %v1450 = vld [vmem:[#allocation7 + $0x270] sm:$0xff]
    %v1451 = vld [vmem:[#allocation7 + $0x278] sm:$0xff]
    %v1452 = vld [vmem:[#allocation7 + $0x280] sm:$0xff]
    %v1453 = vld [vmem:[#allocation7 + $0x288] sm:$0xff]
    %v1454 = vld [vmem:[#allocation7 + $0x290] sm:$0xff]
    %v1455 = vld [vmem:[#allocation7 + $0x298] sm:$0xff]
    %v1456 = vld [vmem:[#allocation7 + $0x2a0] sm:$0xff]
    %v1457 = vld [vmem:[#allocation7 + $0x2a8] sm:$0xff]
    %v1458 = vld [vmem:[#allocation7 + $0x2b0] sm:$0xff]
    %v1459 = vld [vmem:[#allocation7 + $0x2b8] sm:$0xff]
    %v1460 = vld [vmem:[#allocation7 + $0x2c0] sm:$0xff]
    %v1461 = vld [vmem:[#allocation7 + $0x2c8] sm:$0xff]
    %v1462 = vld [vmem:[#allocation7 + $0x2d0] sm:$0xff]
    %v1463 = vld [vmem:[#allocation7 + $0x2d8] sm:$0xff]
    %v1464 = vld [vmem:[#allocation7 + $0x2e0] sm:$0xff]
    %v1465 = vld [vmem:[#allocation7 + $0x2e8] sm:$0xff]
    %v1466 = vld [vmem:[#allocation7 + $0x2f0] sm:$0xff]
    %v1467 = vld [vmem:[#allocation7 + $0x2f8] sm:$0xff]
    %v1468 = vld [vmem:[#allocation7 + $0x300] sm:$0xff]
    %v1469 = vld [vmem:[#allocation7 + $0x308] sm:$0xff]
    %v1470 = vld [vmem:[#allocation7 + $0x310] sm:$0xff]
    %v1471 = vld [vmem:[#allocation7 + $0x318] sm:$0xff]
    %v1472 = vld [vmem:[#allocation7 + $0x320] sm:$0xff]
    %v1473 = vld [vmem:[#allocation7 + $0x328] sm:$0xff]
    %v1474 = vld [vmem:[#allocation7 + $0x330] sm:$0xff]
    %v1475 = vld [vmem:[#allocation7 + $0x338] sm:$0xff]
    %v1476 = vld [vmem:[#allocation7 + $0x340] sm:$0xff]
    %v1477 = vld [vmem:[#allocation7 + $0x348] sm:$0xff]
    %v1478 = vld [vmem:[#allocation7 + $0x350] sm:$0xff]
    %v1479 = vld [vmem:[#allocation7 + $0x358] sm:$0xff]
    %v1480 = vld [vmem:[#allocation7 + $0x360] sm:$0xff]
    %v1481 = vld [vmem:[#allocation7 + $0x368] sm:$0xff]
    %v1482 = vld [vmem:[#allocation7 + $0x370] sm:$0xff]
    %v1483 = vld [vmem:[#allocation7 + $0x378] sm:$0xff]
    %v1484 = vld [vmem:[#allocation7 + $0x380] sm:$0xff]
    %v1485 = vld [vmem:[#allocation7 + $0x388] sm:$0xff]
    %v1486 = vld [vmem:[#allocation7 + $0x390] sm:$0xff]
    %v1487 = vld [vmem:[#allocation7 + $0x398] sm:$0xff]
    %v1488 = vld [vmem:[#allocation7 + $0x3a0] sm:$0xff]
    %v1489 = vld [vmem:[#allocation7 + $0x3a8] sm:$0xff]
    %v1490 = vld [vmem:[#allocation7 + $0x3b0] sm:$0xff]
    %v1491 = vld [vmem:[#allocation7 + $0x3b8] sm:$0xff]
    %v1492 = vld [vmem:[#allocation7 + $0x3c0] sm:$0xff]
    %v1493 = vld [vmem:[#allocation7 + $0x3c8] sm:$0xff]
    %v1494 = vld [vmem:[#allocation7 + $0x3d0] sm:$0xff]
    %v1495 = vld [vmem:[#allocation7 + $0x3d8] sm:$0xff]
    %v1496 = vld [vmem:[#allocation7 + $0x3e0] sm:$0xff]
    %v1497 = vld [vmem:[#allocation7 + $0x3e8] sm:$0xff]
    %v1498 = vld [vmem:[#allocation7 + $0x3f0] sm:$0xff]
    %v1499 = vld [vmem:[#allocation7 + $0x3f8] sm:$0xff]
    %v1500 = vld [vmem:[#allocation7 + $0x400] sm:$0xff]
    %v1501 = vld [vmem:[#allocation7 + $0x408] sm:$0xff]
    %v1502 = vld [vmem:[#allocation7 + $0x410] sm:$0xff]
    %v1503 = vld [vmem:[#allocation7 + $0x418] sm:$0xff]
    %v1504 = vld [vmem:[#allocation7 + $0x420] sm:$0xff]
    %v1505 = vld [vmem:[#allocation7 + $0x428] sm:$0xff]
    %v1506 = vld [vmem:[#allocation7 + $0x430] sm:$0xff]
    %v1507 = vld [vmem:[#allocation7 + $0x438] sm:$0xff]
    %v1508 = vld [vmem:[#allocation7 + $0x440] sm:$0xff]
    %v1509 = vld [vmem:[#allocation7 + $0x448] sm:$0xff]
    %v1510 = vld [vmem:[#allocation7 + $0x450] sm:$0xff]
    %v1511 = vld [vmem:[#allocation7 + $0x458] sm:$0xff]
    %v1512 = vld [vmem:[#allocation7 + $0x460] sm:$0xff]
    %v1513 = vld [vmem:[#allocation7 + $0x468] sm:$0xff]
    %v1514 = vld [vmem:[#allocation7 + $0x470] sm:$0xff]
    %v1515 = vld [vmem:[#allocation7 + $0x478] sm:$0xff]
    %v1516 = vld [vmem:[#allocation7 + $0x480] sm:$0xff]
    %v1517 = vld [vmem:[#allocation7 + $0x488] sm:$0xff]
    %v1518 = vld [vmem:[#allocation7 + $0x490] sm:$0xff]
    %v1519 = vld [vmem:[#allocation7 + $0x498] sm:$0xff]
    %v1520 = vld [vmem:[#allocation7 + $0x4a0] sm:$0xff]
    %v1521 = vld [vmem:[#allocation7 + $0x4a8] sm:$0xff]
    %v1522 = vld [vmem:[#allocation7 + $0x4b0] sm:$0xff]
    %v1523 = vld [vmem:[#allocation7 + $0x4b8] sm:$0xff]
    %v1524 = vld [vmem:[#allocation7 + $0x4c0] sm:$0xff]
    %v1525 = vld [vmem:[#allocation7 + $0x4c8] sm:$0xff]
    %v1526 = vld [vmem:[#allocation7 + $0x4d0] sm:$0xff]
    %v1527 = vld [vmem:[#allocation7 + $0x4d8] sm:$0xff]
    %v1528 = vld [vmem:[#allocation7 + $0x4e0] sm:$0xff]
    %v1529 = vld [vmem:[#allocation7 + $0x4e8] sm:$0xff]
    %v1530 = vld [vmem:[#allocation7 + $0x4f0] sm:$0xff]
    %v1531 = vld [vmem:[#allocation7 + $0x4f8] sm:$0xff]
    %v1532 = vld [vmem:[#allocation7 + $0x500] sm:$0xff]
    %v1533 = vld [vmem:[#allocation7 + $0x508] sm:$0xff]
    %v1534 = vld [vmem:[#allocation7 + $0x510] sm:$0xff]
    %v1535 = vld [vmem:[#allocation7 + $0x518] sm:$0xff]
    %v1536 = vld [vmem:[#allocation7 + $0x520] sm:$0xff]
    %v1537 = vld [vmem:[#allocation7 + $0x528] sm:$0xff]
    %v1538 = vld [vmem:[#allocation7 + $0x530] sm:$0xff]
    %v1539 = vld [vmem:[#allocation7 + $0x538] sm:$0xff]
    %v1540 = vld [vmem:[#allocation7 + $0x540] sm:$0xff]
    %v1541 = vld [vmem:[#allocation7 + $0x548] sm:$0xff]
    %v1542 = vld [vmem:[#allocation7 + $0x550] sm:$0xff]
    %v1543 = vld [vmem:[#allocation7 + $0x558] sm:$0xff]
    %v1544 = vld [vmem:[#allocation7 + $0x560] sm:$0xff]
    %v1545 = vld [vmem:[#allocation7 + $0x568] sm:$0xff]
    %v1546 = vld [vmem:[#allocation7 + $0x570] sm:$0xff]
    %v1547 = vld [vmem:[#allocation7 + $0x578] sm:$0xff]
    %v1548 = vld [vmem:[#allocation7 + $0x580] sm:$0xff]
    %v1549 = vld [vmem:[#allocation7 + $0x588] sm:$0xff]
    %v1550 = vld [vmem:[#allocation7 + $0x590] sm:$0xff]
    %v1551 = vld [vmem:[#allocation7 + $0x598] sm:$0xff]
    %v1552 = vld [vmem:[#allocation7 + $0x5a0] sm:$0xff]
    %v1553 = vld [vmem:[#allocation7 + $0x5a8] sm:$0xff]
    %v1554 = vld [vmem:[#allocation7 + $0x5b0] sm:$0xff]
    %v1555 = vld [vmem:[#allocation7 + $0x5b8] sm:$0xff]
    %v1556 = vld [vmem:[#allocation7 + $0x5c0] sm:$0xff]
    %v1557 = vld [vmem:[#allocation7 + $0x5c8] sm:$0xff]
    %v1558 = vld [vmem:[#allocation7 + $0x5d0] sm:$0xff]
    %v1559 = vld [vmem:[#allocation7 + $0x5d8] sm:$0xff]
    %v1560 = vld [vmem:[#allocation7 + $0x5e0] sm:$0xff]
    %v1561 = vld [vmem:[#allocation7 + $0x5e8] sm:$0xff]
    %v1562 = vld [vmem:[#allocation7 + $0x5f0] sm:$0xff]
    %v1563 = vld [vmem:[#allocation7 + $0x5f8] sm:$0xff]
    %v1564 = vld [vmem:[#allocation7 + $0x600] sm:$0xff]
    %v1565 = vld [vmem:[#allocation7 + $0x608] sm:$0xff]
    %v1566 = vld [vmem:[#allocation7 + $0x610] sm:$0xff]
    %v1567 = vld [vmem:[#allocation7 + $0x618] sm:$0xff]
    %v1568 = vld [vmem:[#allocation7 + $0x620] sm:$0xff]
    %v1569 = vld [vmem:[#allocation7 + $0x628] sm:$0xff]
    %v1570 = vld [vmem:[#allocation7 + $0x630] sm:$0xff]
    %v1571 = vld [vmem:[#allocation7 + $0x638] sm:$0xff]
    %v1572 = vld [vmem:[#allocation7 + $0x640] sm:$0xff]
    %v1573 = vld [vmem:[#allocation7 + $0x648] sm:$0xff]
    %v1574 = vld [vmem:[#allocation7 + $0x650] sm:$0xff]
    %v1575 = vld [vmem:[#allocation7 + $0x658] sm:$0xff]
    %v1576 = vld [vmem:[#allocation7 + $0x660] sm:$0xff]
    %v1577 = vld [vmem:[#allocation7 + $0x668] sm:$0xff]
    %v1578 = vld [vmem:[#allocation7 + $0x670] sm:$0xff]
    %v1579 = vld [vmem:[#allocation7 + $0x678] sm:$0xff]
    %v1580 = vld [vmem:[#allocation7 + $0x680] sm:$0xff]
    %v1581 = vld [vmem:[#allocation7 + $0x688] sm:$0xff]
    %v1582 = vld [vmem:[#allocation7 + $0x690] sm:$0xff]
    %v1583 = vld [vmem:[#allocation7 + $0x698] sm:$0xff]
    %v1584 = vld [vmem:[#allocation7 + $0x6a0] sm:$0xff]
    %v1585 = vld [vmem:[#allocation7 + $0x6a8] sm:$0xff]
    %v1586 = vld [vmem:[#allocation7 + $0x6b0] sm:$0xff]
    %v1587 = vld [vmem:[#allocation7 + $0x6b8] sm:$0xff]
    %v1588 = vld [vmem:[#allocation7 + $0x6c0] sm:$0xff]
    %v1589 = vld [vmem:[#allocation7 + $0x6c8] sm:$0xff]
    %v1590 = vld [vmem:[#allocation7 + $0x6d0] sm:$0xff]
    %v1591 = vld [vmem:[#allocation7 + $0x6d8] sm:$0xff]
    %v1592 = vld [vmem:[#allocation7 + $0x6e0] sm:$0xff]
    %v1593 = vld [vmem:[#allocation7 + $0x6e8] sm:$0xff]
    %v1594 = vld [vmem:[#allocation7 + $0x6f0] sm:$0xff]
    %v1595 = vld [vmem:[#allocation7 + $0x6f8] sm:$0xff]
    %v1596 = vld [vmem:[#allocation7 + $0x700] sm:$0xff]
    %v1597 = vld [vmem:[#allocation7 + $0x708] sm:$0xff]
    %v1598 = vld [vmem:[#allocation7 + $0x710] sm:$0xff]
    %v1599 = vld [vmem:[#allocation7 + $0x718] sm:$0xff]
    %v1600 = vld [vmem:[#allocation7 + $0x720] sm:$0xff]
    %v1601 = vld [vmem:[#allocation7 + $0x728] sm:$0xff]
    %v1602 = vld [vmem:[#allocation7 + $0x730] sm:$0xff]
    %v1603 = vld [vmem:[#allocation7 + $0x738] sm:$0xff]
    %v1604 = vld [vmem:[#allocation7 + $0x740] sm:$0xff]
    %v1605 = vld [vmem:[#allocation7 + $0x748] sm:$0xff]
    %v1606 = vld [vmem:[#allocation7 + $0x750] sm:$0xff]
    %v1607 = vld [vmem:[#allocation7 + $0x758] sm:$0xff]
    %v1608 = vld [vmem:[#allocation7 + $0x760] sm:$0xff]
    %v1609 = vld [vmem:[#allocation7 + $0x768] sm:$0xff]
    %v1610 = vld [vmem:[#allocation7 + $0x770] sm:$0xff]
    %v1611 = vld [vmem:[#allocation7 + $0x778] sm:$0xff]
    %v1612 = vld [vmem:[#allocation7 + $0x780] sm:$0xff]
    %v1613 = vld [vmem:[#allocation7 + $0x788] sm:$0xff]
    %v1614 = vld [vmem:[#allocation7 + $0x790] sm:$0xff]
    %v1615 = vld [vmem:[#allocation7 + $0x798] sm:$0xff]
    %v1616 = vld [vmem:[#allocation7 + $0x7a0] sm:$0xff]
    %v1617 = vld [vmem:[#allocation7 + $0x7a8] sm:$0xff]
    %v1618 = vld [vmem:[#allocation7 + $0x7b0] sm:$0xff]
    %v1619 = vld [vmem:[#allocation7 + $0x7b8] sm:$0xff]
    %v1620 = vld [vmem:[#allocation7 + $0x7c0] sm:$0xff]
    %v1621 = vld [vmem:[#allocation7 + $0x7c8] sm:$0xff]
    %v1622 = vld [vmem:[#allocation7 + $0x7d0] sm:$0xff]
    %v1623 = vld [vmem:[#allocation7 + $0x7d8] sm:$0xff]
    %v1624 = vld [vmem:[#allocation7 + $0x7e0] sm:$0xff]
    %v1625 = vld [vmem:[#allocation7 + $0x7e8] sm:$0xff]
    %v1626 = vld [vmem:[#allocation7 + $0x7f0] sm:$0xff]
    %v1627 = vld [vmem:[#allocation7 + $0x7f8] sm:$0xff]
    %1628 = vmatprep.subr.mxu0 %v1433
    %1629 = vmatpush1.msra.mxu0 %v1432
    %1630 = vmatprep.subr.mxu0 %v1429
    %1631 = vmatpush1.msra.mxu0 %v1428
    %1632 = vmatprep.subr.mxu0 %v1425
    %1633 = vmatpush1.msra.mxu0 %v1424
    %1634 = vmatprep.subr.mxu0 %v1421
    %1635 = vmatpush1.msra.mxu0 %v1420
    %1636 = vmatprep.subr.mxu0 %v1417
    %1637 = vmatpush1.msra.mxu0 %v1416
    %1638 = vmatprep.subr.mxu0 %v1413
    %1639 = vmatpush1.msra.mxu0 %v1412
    %1640 = vmatprep.subr.mxu0 %v1409
    %1641 = vmatpush1.msra.mxu0 %v1408
    %1642 = vmatprep.subr.mxu0 %v1405
    %1643 = vmatpush1.msra.mxu0 %v1404
    %1644 = vmatprep.subr.mxu0 %v1401
    %1645 = vmatpush1.msra.mxu0 %v1400
    %1646 = vmatprep.subr.mxu0 %v1397
    %1647 = vmatpush1.msra.mxu0 %v1396
    %1648 = vmatprep.subr.mxu0 %v1393
    %1649 = vmatpush1.msra.mxu0 %v1392
    %1650 = vmatprep.subr.mxu0 %v1389
    %1651 = vmatpush1.msra.mxu0 %v1388
    %1652 = vmatprep.subr.mxu0 %v1385
    %1653 = vmatpush1.msra.mxu0 %v1384
    %1654 = vmatprep.subr.mxu0 %v1381
    %1655 = vmatpush1.msra.mxu0 %v1380
    %1656 = vmatprep.subr.mxu0 %v1377
    %1657 = vmatpush1.msra.mxu0 %v1376
    %1658 = vmatprep.subr.mxu0 %v1373
    %1659 = vmatpush1.msra.mxu0 %v1372
    %1660 = vmatprep.subr.mxu0 %v1497
    %1661 = vmatpush2.msra.mxu0 %v1496
    %1662 = vmatprep.subr.mxu0 %v1493
    %1663 = vmatpush2.msra.mxu0 %v1492
    %1664 = vmatprep.subr.mxu0 %v1489
    %1665 = vmatpush2.msra.mxu0 %v1488
    %1666 = vmatprep.subr.mxu0 %v1485
    %1667 = vmatpush2.msra.mxu0 %v1484
    %1668 = vmatprep.subr.mxu0 %v1481
    %1669 = vmatpush2.msra.mxu0 %v1480
    %1670 = vmatprep.subr.mxu0 %v1477
    %1671 = vmatpush2.msra.mxu0 %v1476
    %1672 = vmatprep.subr.mxu0 %v1473
    %1673 = vmatpush2.msra.mxu0 %v1472
    %1674 = vmatprep.subr.mxu0 %v1469
    %1675 = vmatpush2.msra.mxu0 %v1468
    %1676 = vmatprep.subr.mxu0 %v1465
    %1677 = vmatpush2.msra.mxu0 %v1464
    %1678 = vmatprep.subr.mxu0 %v1461
    %1679 = vmatpush2.msra.mxu0 %v1460
    %1680 = vmatprep.subr.mxu0 %v1457
    %1681 = vmatpush2.msra.mxu0 %v1456
    %1682 = vmatprep.subr.mxu0 %v1453
    %1683 = vmatpush2.msra.mxu0 %v1452
    %1684 = vmatprep.subr.mxu0 %v1449
    %1685 = vmatpush2.msra.mxu0 %v1448
    %1686 = vmatprep.subr.mxu0 %v1445
    %1687 = vmatpush2.msra.mxu0 %v1444
    %1688 = vmatprep.subr.mxu0 %v1441
    %1689 = vmatpush2.msra.mxu0 %v1440
    %1690 = vmatprep.subr.mxu0 %v1437
    %1691 = vmatpush2.msra.mxu0 %v1436
    %1692 = vmatprep.mubr.f32.mxu0 %v1369
    %1693 = vmatmul.mubr.f32.gmra.mxu0 %v1368
    %v1694 = vpop.f32.mrf.mxu0
    %v1695 = vadd.f32 0.0, %v1694
    %v1696 = vpop.f32.mrf.mxu0
    %v1697 = vadd.f32 0.0, %v1696
    %1698 = vdwg.mxu0
    %1699 = vmatprep.subr.mxu0 %v1561
    %1700 = vmatpush1.msra.mxu0 %v1560
    %1701 = vmatprep.subr.mxu0 %v1557
    %1702 = vmatpush1.msra.mxu0 %v1556
    %1703 = vmatprep.subr.mxu0 %v1553
    %1704 = vmatpush1.msra.mxu0 %v1552
    %1705 = vmatprep.subr.mxu0 %v1549
    %1706 = vmatpush1.msra.mxu0 %v1548
    %1707 = vmatprep.subr.mxu0 %v1545
    %1708 = vmatpush1.msra.mxu0 %v1544
    %1709 = vmatprep.subr.mxu0 %v1541
    %1710 = vmatpush1.msra.mxu0 %v1540
    %1711 = vmatprep.subr.mxu0 %v1537
    %1712 = vmatpush1.msra.mxu0 %v1536
    %1713 = vmatprep.subr.mxu0 %v1533
    %1714 = vmatpush1.msra.mxu0 %v1532
    %1715 = vmatprep.subr.mxu0 %v1529
    %1716 = vmatpush1.msra.mxu0 %v1528
    %1717 = vmatprep.subr.mxu0 %v1525
    %1718 = vmatpush1.msra.mxu0 %v1524
    %1719 = vmatprep.subr.mxu0 %v1521
    %1720 = vmatpush1.msra.mxu0 %v1520
    %1721 = vmatprep.subr.mxu0 %v1517
    %1722 = vmatpush1.msra.mxu0 %v1516
    %1723 = vmatprep.subr.mxu0 %v1513
    %1724 = vmatpush1.msra.mxu0 %v1512
    %1725 = vmatprep.subr.mxu0 %v1509
    %1726 = vmatpush1.msra.mxu0 %v1508
    %1727 = vmatprep.subr.mxu0 %v1505
    %1728 = vmatpush1.msra.mxu0 %v1504
    %1729 = vmatprep.subr.mxu0 %v1501
    %1730 = vmatpush1.msra.mxu0 %v1500
    %1731 = vmatprep.subr.mxu0 %v1625
    %1732 = vmatpush2.msra.mxu0 %v1624
    %1733 = vmatprep.subr.mxu0 %v1621
    %1734 = vmatpush2.msra.mxu0 %v1620
    %1735 = vmatprep.subr.mxu0 %v1617
    %1736 = vmatpush2.msra.mxu0 %v1616
    %1737 = vmatprep.subr.mxu0 %v1613
    %1738 = vmatpush2.msra.mxu0 %v1612
    %1739 = vmatprep.subr.mxu0 %v1609
    %1740 = vmatpush2.msra.mxu0 %v1608
    %1741 = vmatprep.subr.mxu0 %v1605
    %1742 = vmatpush2.msra.mxu0 %v1604
    %1743 = vmatprep.subr.mxu0 %v1601
    %1744 = vmatpush2.msra.mxu0 %v1600
    %1745 = vmatprep.subr.mxu0 %v1597
    %1746 = vmatpush2.msra.mxu0 %v1596
    %1747 = vmatprep.subr.mxu0 %v1593
    %1748 = vmatpush2.msra.mxu0 %v1592
    %1749 = vmatprep.subr.mxu0 %v1589
    %1750 = vmatpush2.msra.mxu0 %v1588
    %1751 = vmatprep.subr.mxu0 %v1585
    %1752 = vmatpush2.msra.mxu0 %v1584
    %1753 = vmatprep.subr.mxu0 %v1581
    %1754 = vmatpush2.msra.mxu0 %v1580
    %1755 = vmatprep.subr.mxu0 %v1577
    %1756 = vmatpush2.msra.mxu0 %v1576
    %1757 = vmatprep.subr.mxu0 %v1573
    %1758 = vmatpush2.msra.mxu0 %v1572
    %1759 = vmatprep.subr.mxu0 %v1569
    %1760 = vmatpush2.msra.mxu0 %v1568
    %1761 = vmatprep.subr.mxu0 %v1565
    %1762 = vmatpush2.msra.mxu0 %v1564
    %1763 = vmatprep.mubr.f32.mxu0 %v1371
    %1764 = vmatmul.mubr.f32.gmra.mxu0 %v1370
    %v1765 = vpop.f32.mrf.mxu0
    %v1766 = vadd.f32 %v1695, %v1765
    %v1767 = vpop.f32.mrf.mxu0
    %v1768 = vadd.f32 %v1697, %v1767
    %1769 = vdwg.mxu0
    %1770 = vmatprep.subr.mxu0 %v1435
    %1771 = vmatpush1.msra.mxu0 %v1434
    %1772 = vmatprep.subr.mxu0 %v1431
    %1773 = vmatpush1.msra.mxu0 %v1430
    %1774 = vmatprep.subr.mxu0 %v1427
    %1775 = vmatpush1.msra.mxu0 %v1426
    %1776 = vmatprep.subr.mxu0 %v1423
    %1777 = vmatpush1.msra.mxu0 %v1422
    %1778 = vmatprep.subr.mxu0 %v1419
    %1779 = vmatpush1.msra.mxu0 %v1418
    %1780 = vmatprep.subr.mxu0 %v1415
    %1781 = vmatpush1.msra.mxu0 %v1414
    %1782 = vmatprep.subr.mxu0 %v1411
    %1783 = vmatpush1.msra.mxu0 %v1410
    %1784 = vmatprep.subr.mxu0 %v1407
    %1785 = vmatpush1.msra.mxu0 %v1406
    %1786 = vmatprep.subr.mxu0 %v1403
    %1787 = vmatpush1.msra.mxu0 %v1402
    %1788 = vmatprep.subr.mxu0 %v1399
    %1789 = vmatpush1.msra.mxu0 %v1398
    %1790 = vmatprep.subr.mxu0 %v1395
    %1791 = vmatpush1.msra.mxu0 %v1394
    %1792 = vmatprep.subr.mxu0 %v1391
    %1793 = vmatpush1.msra.mxu0 %v1390
    %1794 = vmatprep.subr.mxu0 %v1387
    %1795 = vmatpush1.msra.mxu0 %v1386
    %1796 = vmatprep.subr.mxu0 %v1383
    %1797 = vmatpush1.msra.mxu0 %v1382
    %1798 = vmatprep.subr.mxu0 %v1379
    %1799 = vmatpush1.msra.mxu0 %v1378
    %1800 = vmatprep.subr.mxu0 %v1375
    %1801 = vmatpush1.msra.mxu0 %v1374
    %1802 = vmatprep.subr.mxu0 %v1499
    %1803 = vmatpush2.msra.mxu0 %v1498
    %1804 = vmatprep.subr.mxu0 %v1495
    %1805 = vmatpush2.msra.mxu0 %v1494
    %1806 = vmatprep.subr.mxu0 %v1491
    %1807 = vmatpush2.msra.mxu0 %v1490
    %1808 = vmatprep.subr.mxu0 %v1487
    %1809 = vmatpush2.msra.mxu0 %v1486
    %1810 = vmatprep.subr.mxu0 %v1483
    %1811 = vmatpush2.msra.mxu0 %v1482
    %1812 = vmatprep.subr.mxu0 %v1479
    %1813 = vmatpush2.msra.mxu0 %v1478
    %1814 = vmatprep.subr.mxu0 %v1475
    %1815 = vmatpush2.msra.mxu0 %v1474
    %1816 = vmatprep.subr.mxu0 %v1471
    %1817 = vmatpush2.msra.mxu0 %v1470
    %1818 = vmatprep.subr.mxu0 %v1467
    %1819 = vmatpush2.msra.mxu0 %v1466
    %1820 = vmatprep.subr.mxu0 %v1463
    %1821 = vmatpush2.msra.mxu0 %v1462
    %1822 = vmatprep.subr.mxu0 %v1459
    %1823 = vmatpush2.msra.mxu0 %v1458
    %1824 = vmatprep.subr.mxu0 %v1455
    %1825 = vmatpush2.msra.mxu0 %v1454
    %1826 = vmatprep.subr.mxu0 %v1451
    %1827 = vmatpush2.msra.mxu0 %v1450
    %1828 = vmatprep.subr.mxu0 %v1447
    %1829 = vmatpush2.msra.mxu0 %v1446
    %1830 = vmatprep.subr.mxu0 %v1443
    %1831 = vmatpush2.msra.mxu0 %v1442
    %1832 = vmatprep.subr.mxu0 %v1439
    %1833 = vmatpush2.msra.mxu0 %v1438
    %1834 = vmatprep.mubr.f32.mxu0 %v1369
    %1835 = vmatmul.mubr.f32.gmra.mxu0 %v1368
    %v1836 = vpop.f32.mrf.mxu0
    %v1837 = vadd.f32 0.0, %v1836
    %v1838 = vpop.f32.mrf.mxu0
    %v1839 = vadd.f32 0.0, %v1838
    %1840 = vdwg.mxu0
    %1841 = vmatprep.subr.mxu0 %v1563
    %1842 = vmatpush1.msra.mxu0 %v1562
    %1843 = vmatprep.subr.mxu0 %v1559
    %1844 = vmatpush1.msra.mxu0 %v1558
    %1845 = vmatprep.subr.mxu0 %v1555
    %1846 = vmatpush1.msra.mxu0 %v1554
    %1847 = vmatprep.subr.mxu0 %v1551
    %1848 = vmatpush1.msra.mxu0 %v1550
    %1849 = vmatprep.subr.mxu0 %v1547
    %1850 = vmatpush1.msra.mxu0 %v1546
    %1851 = vmatprep.subr.mxu0 %v1543
    %1852 = vmatpush1.msra.mxu0 %v1542
    %1853 = vmatprep.subr.mxu0 %v1539
    %1854 = vmatpush1.msra.mxu0 %v1538
    %1855 = vmatprep.subr.mxu0 %v1535
    %1856 = vmatpush1.msra.mxu0 %v1534
    %1857 = vmatprep.subr.mxu0 %v1531
    %1858 = vmatpush1.msra.mxu0 %v1530
    %1859 = vmatprep.subr.mxu0 %v1527
    %1860 = vmatpush1.msra.mxu0 %v1526
    %1861 = vmatprep.subr.mxu0 %v1523
    %1862 = vmatpush1.msra.mxu0 %v1522
    %1863 = vmatprep.subr.mxu0 %v1519
    %1864 = vmatpush1.msra.mxu0 %v1518
    %1865 = vmatprep.subr.mxu0 %v1515
    %1866 = vmatpush1.msra.mxu0 %v1514
    %1867 = vmatprep.subr.mxu0 %v1511
    %1868 = vmatpush1.msra.mxu0 %v1510
    %1869 = vmatprep.subr.mxu0 %v1507
    %1870 = vmatpush1.msra.mxu0 %v1506
    %1871 = vmatprep.subr.mxu0 %v1503
    %1872 = vmatpush1.msra.mxu0 %v1502
    %1873 = vmatprep.subr.mxu0 %v1627
    %1874 = vmatpush2.msra.mxu0 %v1626
    %1875 = vmatprep.subr.mxu0 %v1623
    %1876 = vmatpush2.msra.mxu0 %v1622
    %1877 = vmatprep.subr.mxu0 %v1619
    %1878 = vmatpush2.msra.mxu0 %v1618
    %1879 = vmatprep.subr.mxu0 %v1615
    %1880 = vmatpush2.msra.mxu0 %v1614
    %1881 = vmatprep.subr.mxu0 %v1611
    %1882 = vmatpush2.msra.mxu0 %v1610
    %1883 = vmatprep.subr.mxu0 %v1607
    %1884 = vmatpush2.msra.mxu0 %v1606
    %1885 = vmatprep.subr.mxu0 %v1603
    %1886 = vmatpush2.msra.mxu0 %v1602
    %1887 = vmatprep.subr.mxu0 %v1599
    %1888 = vmatpush2.msra.mxu0 %v1598
    %1889 = vmatprep.subr.mxu0 %v1595
    %1890 = vmatpush2.msra.mxu0 %v1594
    %1891 = vmatprep.subr.mxu0 %v1591
    %1892 = vmatpush2.msra.mxu0 %v1590
    %1893 = vmatprep.subr.mxu0 %v1587
    %1894 = vmatpush2.msra.mxu0 %v1586
    %1895 = vmatprep.subr.mxu0 %v1583
    %1896 = vmatpush2.msra.mxu0 %v1582
    %1897 = vmatprep.subr.mxu0 %v1579
    %1898 = vmatpush2.msra.mxu0 %v1578
    %1899 = vmatprep.subr.mxu0 %v1575
    %1900 = vmatpush2.msra.mxu0 %v1574
    %1901 = vmatprep.subr.mxu0 %v1571
    %1902 = vmatpush2.msra.mxu0 %v1570
    %1903 = vmatprep.subr.mxu0 %v1567
    %1904 = vmatpush2.msra.mxu0 %v1566
    %1905 = vmatprep.mubr.f32.mxu0 %v1371
    %1906 = vmatmul.mubr.f32.gmra.mxu0 %v1370
    %v1907 = vpop.f32.mrf.mxu0
    %v1908 = vadd.f32 %v1837, %v1907
    %v1909 = vpop.f32.mrf.mxu0
    %v1910 = vadd.f32 %v1839, %v1909
    %1911 = vdwg.mxu0
    %v1912 = vmul.f32 %v1766, %v1766
    %v1913 = vmul.f32 %v1768, %v1768
    %v1914 = vmul.f32 %v1908, %v1908
    %v1915 = vmul.f32 %v1910, %v1910
    %v1916 = vld [vmem:[#allocation8] sm:$0xff]
    %v1917 = vld [vmem:[#allocation8 + $0x8] sm:$0xff]
    %v1918 = vld [vmem:[#allocation8 + $0x10] sm:$0xff]
    %v1919 = vld [vmem:[#allocation8 + $0x18] sm:$0xff]
    %v1920 = vld [vmem:[#allocation8 + $0x20] sm:$0xff]
    %v1921 = vld [vmem:[#allocation8 + $0x28] sm:$0xff]
    %v1922 = vld [vmem:[#allocation8 + $0x30] sm:$0xff]
    %v1923 = vld [vmem:[#allocation8 + $0x38] sm:$0xff]
    %v1924 = vld [vmem:[#allocation8 + $0x40] sm:$0xff]
    %v1925 = vld [vmem:[#allocation8 + $0x48] sm:$0xff]
    %v1926 = vld [vmem:[#allocation8 + $0x50] sm:$0xff]
    %v1927 = vld [vmem:[#allocation8 + $0x58] sm:$0xff]
    %v1928 = vld [vmem:[#allocation8 + $0x60] sm:$0xff]
    %v1929 = vld [vmem:[#allocation8 + $0x68] sm:$0xff]
    %v1930 = vld [vmem:[#allocation8 + $0x70] sm:$0xff]
    %v1931 = vld [vmem:[#allocation8 + $0x78] sm:$0xff]
    %v1932 = vld [vmem:[#allocation8 + $0x80] sm:$0xff]
    %v1933 = vld [vmem:[#allocation8 + $0x88] sm:$0xff]
    %v1934 = vld [vmem:[#allocation8 + $0x90] sm:$0xff]
    %v1935 = vld [vmem:[#allocation8 + $0x98] sm:$0xff]
    %v1936 = vld [vmem:[#allocation8 + $0xa0] sm:$0xff]
    %v1937 = vld [vmem:[#allocation8 + $0xa8] sm:$0xff]
    %v1938 = vld [vmem:[#allocation8 + $0xb0] sm:$0xff]
    %v1939 = vld [vmem:[#allocation8 + $0xb8] sm:$0xff]
    %v1940 = vld [vmem:[#allocation8 + $0xc0] sm:$0xff]
    %v1941 = vld [vmem:[#allocation8 + $0xc8] sm:$0xff]
    %v1942 = vld [vmem:[#allocation8 + $0xd0] sm:$0xff]
    %v1943 = vld [vmem:[#allocation8 + $0xd8] sm:$0xff]
    %v1944 = vld [vmem:[#allocation8 + $0xe0] sm:$0xff]
    %v1945 = vld [vmem:[#allocation8 + $0xe8] sm:$0xff]
    %v1946 = vld [vmem:[#allocation8 + $0xf0] sm:$0xff]
    %v1947 = vld [vmem:[#allocation8 + $0xf8] sm:$0xff]
    %v1948 = vld [vmem:[#allocation8 + $0x100] sm:$0xff]
    %v1949 = vld [vmem:[#allocation8 + $0x108] sm:$0xff]
    %v1950 = vld [vmem:[#allocation8 + $0x110] sm:$0xff]
    %v1951 = vld [vmem:[#allocation8 + $0x118] sm:$0xff]
    %v1952 = vld [vmem:[#allocation8 + $0x120] sm:$0xff]
    %v1953 = vld [vmem:[#allocation8 + $0x128] sm:$0xff]
    %v1954 = vld [vmem:[#allocation8 + $0x130] sm:$0xff]
    %v1955 = vld [vmem:[#allocation8 + $0x138] sm:$0xff]
    %v1956 = vld [vmem:[#allocation8 + $0x140] sm:$0xff]
    %v1957 = vld [vmem:[#allocation8 + $0x148] sm:$0xff]
    %v1958 = vld [vmem:[#allocation8 + $0x150] sm:$0xff]
    %v1959 = vld [vmem:[#allocation8 + $0x158] sm:$0xff]
    %v1960 = vld [vmem:[#allocation8 + $0x160] sm:$0xff]
    %v1961 = vld [vmem:[#allocation8 + $0x168] sm:$0xff]
    %v1962 = vld [vmem:[#allocation8 + $0x170] sm:$0xff]
    %v1963 = vld [vmem:[#allocation8 + $0x178] sm:$0xff]
    %v1964 = vld [vmem:[#allocation8 + $0x180] sm:$0xff]
    %v1965 = vld [vmem:[#allocation8 + $0x188] sm:$0xff]
    %v1966 = vld [vmem:[#allocation8 + $0x190] sm:$0xff]
    %v1967 = vld [vmem:[#allocation8 + $0x198] sm:$0xff]
    %v1968 = vld [vmem:[#allocation8 + $0x1a0] sm:$0xff]
    %v1969 = vld [vmem:[#allocation8 + $0x1a8] sm:$0xff]
    %v1970 = vld [vmem:[#allocation8 + $0x1b0] sm:$0xff]
    %v1971 = vld [vmem:[#allocation8 + $0x1b8] sm:$0xff]
    %v1972 = vld [vmem:[#allocation8 + $0x1c0] sm:$0xff]
    %v1973 = vld [vmem:[#allocation8 + $0x1c8] sm:$0xff]
    %v1974 = vld [vmem:[#allocation8 + $0x1d0] sm:$0xff]
    %v1975 = vld [vmem:[#allocation8 + $0x1d8] sm:$0xff]
    %v1976 = vld [vmem:[#allocation8 + $0x1e0] sm:$0xff]
    %v1977 = vld [vmem:[#allocation8 + $0x1e8] sm:$0xff]
    %v1978 = vld [vmem:[#allocation8 + $0x1f0] sm:$0xff]
    %v1979 = vld [vmem:[#allocation8 + $0x1f8] sm:$0xff]
    %1980 = vmatprep.subr.mxu0 0.0
    %1981 = vmatpush1.msra.mxu0 %v1931
    %1982 = vmatprep.subr.mxu0 0.0
    %1983 = vmatpush1.msra.mxu0 %v1930
    %1984 = vmatprep.subr.mxu0 0.0
    %1985 = vmatpush1.msra.mxu0 %v1929
    %1986 = vmatprep.subr.mxu0 0.0
    %1987 = vmatpush1.msra.mxu0 %v1928
    %1988 = vmatprep.subr.mxu0 0.0
    %1989 = vmatpush1.msra.mxu0 %v1927
    %1990 = vmatprep.subr.mxu0 0.0
    %1991 = vmatpush1.msra.mxu0 %v1926
    %1992 = vmatprep.subr.mxu0 0.0
    %1993 = vmatpush1.msra.mxu0 %v1925
    %1994 = vmatprep.subr.mxu0 0.0
    %1995 = vmatpush1.msra.mxu0 %v1924
    %1996 = vmatprep.subr.mxu0 0.0
    %1997 = vmatpush1.msra.mxu0 %v1923
    %1998 = vmatprep.subr.mxu0 0.0
    %1999 = vmatpush1.msra.mxu0 %v1922
    %2000 = vmatprep.subr.mxu0 0.0
    %2001 = vmatpush1.msra.mxu0 %v1921
    %2002 = vmatprep.subr.mxu0 0.0
    %2003 = vmatpush1.msra.mxu0 %v1920
    %2004 = vmatprep.subr.mxu0 0.0
    %2005 = vmatpush1.msra.mxu0 %v1919
    %2006 = vmatprep.subr.mxu0 0.0
    %2007 = vmatpush1.msra.mxu0 %v1918
    %2008 = vmatprep.subr.mxu0 0.0
    %2009 = vmatpush1.msra.mxu0 %v1917
    %2010 = vmatprep.subr.mxu0 0.0
    %2011 = vmatpush1.msra.mxu0 %v1916
    %2012 = vmatprep.subr.mxu0 0.0
    %2013 = vmatpush2.msra.mxu0 %v1947
    %2014 = vmatprep.subr.mxu0 0.0
    %2015 = vmatpush2.msra.mxu0 %v1946
    %2016 = vmatprep.subr.mxu0 0.0
    %2017 = vmatpush2.msra.mxu0 %v1945
    %2018 = vmatprep.subr.mxu0 0.0
    %2019 = vmatpush2.msra.mxu0 %v1944
    %2020 = vmatprep.subr.mxu0 0.0
    %2021 = vmatpush2.msra.mxu0 %v1943
    %2022 = vmatprep.subr.mxu0 0.0
    %2023 = vmatpush2.msra.mxu0 %v1942
    %2024 = vmatprep.subr.mxu0 0.0
    %2025 = vmatpush2.msra.mxu0 %v1941
    %2026 = vmatprep.subr.mxu0 0.0
    %2027 = vmatpush2.msra.mxu0 %v1940
    %2028 = vmatprep.subr.mxu0 0.0
    %2029 = vmatpush2.msra.mxu0 %v1939
    %2030 = vmatprep.subr.mxu0 0.0
    %2031 = vmatpush2.msra.mxu0 %v1938
    %2032 = vmatprep.subr.mxu0 0.0
    %2033 = vmatpush2.msra.mxu0 %v1937
    %2034 = vmatprep.subr.mxu0 0.0
    %2035 = vmatpush2.msra.mxu0 %v1936
    %2036 = vmatprep.subr.mxu0 0.0
    %2037 = vmatpush2.msra.mxu0 %v1935
    %2038 = vmatprep.subr.mxu0 0.0
    %2039 = vmatpush2.msra.mxu0 %v1934
    %2040 = vmatprep.subr.mxu0 0.0
    %2041 = vmatpush2.msra.mxu0 %v1933
    %2042 = vmatprep.subr.mxu0 0.0
    %2043 = vmatpush2.msra.mxu0 %v1932
    %2044 = vmatprep.mubr.f32.mxu0 %v1913
    %2045 = vmatmul.mubr.f32.gmra.mxu0 %v1912
    %v2046 = vpop.f32.mrf.mxu0
    %v2047 = vadd.f32 0.0, %v2046
    %v2048 = vpop.f32.mrf.mxu0
    %2049 = vdwg.mxu0
    %2050 = vmatprep.subr.mxu0 0.0
    %2051 = vmatpush1.msra.mxu0 %v1963
    %2052 = vmatprep.subr.mxu0 0.0
    %2053 = vmatpush1.msra.mxu0 %v1962
    %2054 = vmatprep.subr.mxu0 0.0
    %2055 = vmatpush1.msra.mxu0 %v1961
    %2056 = vmatprep.subr.mxu0 0.0
    %2057 = vmatpush1.msra.mxu0 %v1960
    %2058 = vmatprep.subr.mxu0 0.0
    %2059 = vmatpush1.msra.mxu0 %v1959
    %2060 = vmatprep.subr.mxu0 0.0
    %2061 = vmatpush1.msra.mxu0 %v1958
    %2062 = vmatprep.subr.mxu0 0.0
    %2063 = vmatpush1.msra.mxu0 %v1957
    %2064 = vmatprep.subr.mxu0 0.0
    %2065 = vmatpush1.msra.mxu0 %v1956
    %2066 = vmatprep.subr.mxu0 0.0
    %2067 = vmatpush1.msra.mxu0 %v1955
    %2068 = vmatprep.subr.mxu0 0.0
    %2069 = vmatpush1.msra.mxu0 %v1954
    %2070 = vmatprep.subr.mxu0 0.0
    %2071 = vmatpush1.msra.mxu0 %v1953
    %2072 = vmatprep.subr.mxu0 0.0
    %2073 = vmatpush1.msra.mxu0 %v1952
    %2074 = vmatprep.subr.mxu0 0.0
    %2075 = vmatpush1.msra.mxu0 %v1951
    %2076 = vmatprep.subr.mxu0 0.0
    %2077 = vmatpush1.msra.mxu0 %v1950
    %2078 = vmatprep.subr.mxu0 0.0
    %2079 = vmatpush1.msra.mxu0 %v1949
    %2080 = vmatprep.subr.mxu0 0.0
    %2081 = vmatpush1.msra.mxu0 %v1948
    %2082 = vmatprep.subr.mxu0 0.0
    %2083 = vmatpush2.msra.mxu0 %v1979
    %2084 = vmatprep.subr.mxu0 0.0
    %2085 = vmatpush2.msra.mxu0 %v1978
    %2086 = vmatprep.subr.mxu0 0.0
    %2087 = vmatpush2.msra.mxu0 %v1977
    %2088 = vmatprep.subr.mxu0 0.0
    %2089 = vmatpush2.msra.mxu0 %v1976
    %2090 = vmatprep.subr.mxu0 0.0
    %2091 = vmatpush2.msra.mxu0 %v1975
    %2092 = vmatprep.subr.mxu0 0.0
    %2093 = vmatpush2.msra.mxu0 %v1974
    %2094 = vmatprep.subr.mxu0 0.0
    %2095 = vmatpush2.msra.mxu0 %v1973
    %2096 = vmatprep.subr.mxu0 0.0
    %2097 = vmatpush2.msra.mxu0 %v1972
    %2098 = vmatprep.subr.mxu0 0.0
    %2099 = vmatpush2.msra.mxu0 %v1971
    %2100 = vmatprep.subr.mxu0 0.0
    %2101 = vmatpush2.msra.mxu0 %v1970
    %2102 = vmatprep.subr.mxu0 0.0
    %2103 = vmatpush2.msra.mxu0 %v1969
    %2104 = vmatprep.subr.mxu0 0.0
    %2105 = vmatpush2.msra.mxu0 %v1968
    %2106 = vmatprep.subr.mxu0 0.0
    %2107 = vmatpush2.msra.mxu0 %v1967
    %2108 = vmatprep.subr.mxu0 0.0
    %2109 = vmatpush2.msra.mxu0 %v1966
    %2110 = vmatprep.subr.mxu0 0.0
    %2111 = vmatpush2.msra.mxu0 %v1965
    %2112 = vmatprep.subr.mxu0 0.0
    %2113 = vmatpush2.msra.mxu0 %v1964
    %2114 = vmatprep.mubr.f32.mxu0 %v1915
    %2115 = vmatmul.mubr.f32.gmra.mxu0 %v1914
    %v2116 = vpop.f32.mrf.mxu0
    %v2117 = vadd.f32 %v2047, %v2116
    %v2118 = vpop.f32.mrf.mxu0
    %2119 = vdwg.mxu0
    %2120 = vst [vmem:[#allocation10] sm:$0xff] %v2117
    // Predicated region
    $region34: #{tpu_custom_call.1} parent=1 // pred_check
      _
    $region35: #{tpu_custom_call.1} parent=1 // pred_check_branch
      %2122 = sbr.rel (0) target = $region37
    $region36: #{tpu_custom_call.1} parent=1 // pred_region
      %s2124 = ssub.s32 128, 128
      %2125 = vsyncadd [#allocation4], %s2124
      %s2127 = sshll.u32 [#allocation10], 4
      %s2128 = int_to_ptr.vmem [resolvable:$true] %s2127
      %2130 = dma.vmem_to_hbm [thread:$0]  %s2128, 128, %s4, [#allocation4]
    $region37: #{tpu_custom_call.1} parent=1 // pred_fallthru
      _
    // Predicated region
    $region38: #{tpu_custom_call.1} parent=1 // pred_check
      _
    $region39: #{tpu_custom_call.1} parent=1 // pred_check_branch
      %2132 = sbr.rel (0) target = $region41
    $region40: #{tpu_custom_call.1} parent=1 // pred_region
      %2133 = dma.done [#allocation4], 128
    $region41: #{tpu_custom_call.1} parent=1 // pred_fallthru
      _
    %2134 = vsyncpa [#allocation3], 1
    %2135 = vsyncpa [#allocation6], 1
    %2136 = vsyncpa [#allocation9], 1
    %2137 = vsyncpa [#allocation4], 1

</llo_original>
